<compile_context>
chip_gen: v7x
topology: tpu7x:2x2x1
jax: 0.10.0
libtpu: 0.0.40
codegen_flags: <defaults>
</compile_context>

<pallas_src>
import functools

import jax
import jax.numpy as jnp
from jax import lax
from jax.experimental import pallas as pl
from jax.experimental.pallas import tpu as pltpu


# ------------------------------ Pallas kernel ------------------------------- #

def _self_attention_kernel(x_ref, mem_ref, wqkv_ref, bqkv_ref, wp_ref, bp_ref,
                           wcz_ref, wcv_ref, bc_ref, pool_ref, up_ref,
                           attn_ref, c3_ref, v6_ref,
                           *, dk, inv_sqrt_dk, inv_sqrt_hw):
    # x_ref:    (1, C,  HW)   inputs, channel-major (HW lane-dense)
    # mem_ref:  (1, Cm, HW)   memory, channel-major
    # wqkv_ref: (2dk+dv, Cm)  fused q/k/v 1x1-conv weights; bqkv_ref (2dk+dv, 1)
    # wp_ref:   (C, dv)       conv_point weights;            bp_ref   (C, 1)
    # wcz/wcv:  (C, C)        conv_channel weight halves;    bc_ref   (C, 1)
    # pool_ref: (Np, HW)      4x4 average-pool matrix (exact, f32)
    # up_ref:   (HW, Np)      bilinear x4 upsample matrix, align_corners=True
    # attn_ref: (1, Np, Np)   spatial attention map (f32)
    # c3_ref:   (1, C, C)     channel attention map (f32)
    # v6_ref:   (1, C, HW)    fused output
    x = x_ref[0]                                                   # (C, HW)  f32
    mem = mem_ref[0]                                               # (Cm, HW) f32

    # --- spatial branch -------------------------------------------------------
    # 4x4 avg-pool as an exact f32 matmul (pool weights are 1/16).
    mem_p = lax.dot_general(mem, pool_ref[...], (((1,), (1,)), ((), ())),
                            preferred_element_type=jnp.float32)    # (Cm, Np)

    qkv = (jnp.dot(wqkv_ref[...].astype(jnp.bfloat16),
                   mem_p.astype(jnp.bfloat16),
                   preferred_element_type=jnp.float32)
           + bqkv_ref[...])                                        # (2dk+dv, Np)
    q = qkv[:dk] * inv_sqrt_dk        # fold 1/sqrt(dk) into q (O(dk*Np))
    k = qkv[dk:2 * dk]
    v = qkv[2 * dk:]

    # s[i, j] = q_i . k_j  — the "transpose" is absorbed by dot_general.
    s = lax.dot_general(q.astype(jnp.bfloat16), k.astype(jnp.bfloat16),
                        (((0,), (0,)), ((), ())),
                        preferred_element_type=jnp.float32)        # (Np, Np)
    m = jnp.max(s, axis=-1, keepdims=True)
    e = jnp.exp(s - m)
    p = e * pl.reciprocal(jnp.sum(e, axis=-1, keepdims=True), approx=True)
    attn_ref[0] = p

    # z_cm[d, i] = sum_j v[d, j] * p[i, j]   (channel-major z, Np lane-dense)
    z_cm = lax.dot_general(v.astype(jnp.bfloat16), p.astype(jnp.bfloat16),
                           (((1,), (1,)), ((), ())),
                           preferred_element_type=jnp.float32)     # (dv, Np)

    # conv_point at low resolution (commutes with the bilinear upsample).
    zp = (jnp.dot(wp_ref[...].astype(jnp.bfloat16), z_cm.astype(jnp.bfloat16),
                  preferred_element_type=jnp.float32)
          + bp_ref[...])                                           # (C, Np)

    # bilinear x4 upsample (align_corners=True) as an f32 matmul.
    z_up = lax.dot_general(zp, up_ref[...], (((1,), (1,)), ((), ())),
                           preferred_element_type=jnp.float32)     # (C, HW)

    # --- channel branch -------------------------------------------------------
    xb = x.astype(jnp.bfloat16)
    s2 = lax.dot_general(xb, xb, (((1,), (1,)), ((), ())),
                         preferred_element_type=jnp.float32) * inv_sqrt_hw  # (C, C)
    m2 = jnp.max(s2, axis=-1, keepdims=True)
    e2 = jnp.exp(s2 - m2)
    p2 = e2 * pl.reciprocal(jnp.sum(e2, axis=-1, keepdims=True), approx=True)
    c3_ref[0] = p2

    v5 = jnp.dot(p2.astype(jnp.bfloat16), xb,
                 preferred_element_type=jnp.float32)               # (C, HW)

    # residuals in f32, then fused "concat + conv_channel" as two matmuls.
    z_res = z_up + x
    v5_res = v5 + x
    v6 = (jnp.dot(wcz_ref[...].astype(jnp.bfloat16), z_res.astype(jnp.bfloat16),
                  preferred_element_type=jnp.float32)
          + jnp.dot(wcv_ref[...].astype(jnp.bfloat16), v5_res.astype(jnp.bfloat16),
                    preferred_element_type=jnp.float32)
          + bc_ref[...])
    v6_ref[0] = v6


# -------------------- constant resampling matrices (wrapper) ----------------- #

def _pool4_matrix(H, W):
    """(Np, HW) matrix implementing AvgPool2d(4) on a row-major flattened grid."""
    h, w = H // 4, W // 4
    py = (jnp.arange(H) // 4 == jnp.arange(h)[:, None]).astype(jnp.float32) / 4.0
    px = (jnp.arange(W) // 4 == jnp.arange(w)[:, None]).astype(jnp.float32) / 4.0
    return jnp.kron(py, px)                                        # (h*w, H*W)


def _upsample4_matrix(h, w):
    """(HW, Np) matrix for bilinear x4 upsample with align_corners=True."""
    def axis_mat(n_out, n_in):
        if n_in == 1:
            return jnp.ones((n_out, 1), jnp.float32)
        s = jnp.arange(n_out, dtype=jnp.float32) * (n_in - 1) / (n_out - 1)
        i0 = jnp.floor(s).astype(jnp.int32)
        i1 = jnp.minimum(i0 + 1, n_in - 1)
        t = s - i0.astype(jnp.float32)
        return (jax.nn.one_hot(i0, n_in, dtype=jnp.float32) * (1.0 - t)[:, None]
                + jax.nn.one_hot(i1, n_in, dtype=jnp.float32) * t[:, None])
    return jnp.kron(axis_mat(4 * h, h), axis_mat(4 * w, w))        # (H*W, h*w)


# --------------------------------- wrapper ----------------------------------- #

def self_attention_forward(params, inputs, memory, dk, dv):
    """inputs (B,C,H,W), memory (B,Cm,H,W) -> (v6, attention, c3)."""
    B, C, H, W = inputs.shape
    _, Cm, _, _ = memory.shape
    HW = H * W
    h, w = H // 4, W // 4
    Np = h * w

    x = inputs.reshape(B, C, HW)
    mem = memory.reshape(B, Cm, HW)

    wqkv = jnp.concatenate([params["wq"], params["wk"], params["wv"]], axis=0)
    bqkv = jnp.concatenate([params["bq"], params["bk"], params["bv"]],
                           axis=0).reshape(-1, 1)
    nqkv = 2 * dk + dv
    wcz, wcv = params["wc"][:, :C], params["wc"][:, C:]

    pool = _pool4_matrix(H, W)                                     # (Np, HW)
    up = _upsample4_matrix(h, w)                                   # (HW, Np)

    kern = functools.partial(_self_attention_kernel, dk=dk,
                             inv_sqrt_dk=1.0 / float(dk) ** 0.5,
                             inv_sqrt_hw=1.0 / float(HW) ** 0.5)

    attn, c3, v6 = pl.pallas_call(
        kern,
        out_shape=(jax.ShapeDtypeStruct((B, Np, Np), jnp.float32),
                   jax.ShapeDtypeStruct((B, C, C), jnp.float32),
                   jax.ShapeDtypeStruct((B, C, HW), jnp.float32)),
        grid=(B,),
        in_specs=[
            pl.BlockSpec((1, C, HW), lambda i: (i, 0, 0)),         # inputs
            pl.BlockSpec((1, Cm, HW), lambda i: (i, 0, 0)),        # memory
            pl.BlockSpec((nqkv, Cm), lambda i: (0, 0)),            # wqkv
            pl.BlockSpec((nqkv, 1), lambda i: (0, 0)),             # bqkv
            pl.BlockSpec((C, dv), lambda i: (0, 0)),               # wp
            pl.BlockSpec((C, 1), lambda i: (0, 0)),                # bp
            pl.BlockSpec((C, C), lambda i: (0, 0)),                # wc (z half)
            pl.BlockSpec((C, C), lambda i: (0, 0)),                # wc (v5 half)
            pl.BlockSpec((C, 1), lambda i: (0, 0)),                # bc
            pl.BlockSpec((Np, HW), lambda i: (0, 0)),              # pool matrix
            pl.BlockSpec((HW, Np), lambda i: (0, 0)),              # upsample matrix
        ],
        out_specs=(pl.BlockSpec((1, Np, Np), lambda i: (i, 0, 0)),
                   pl.BlockSpec((1, C, C), lambda i: (i, 0, 0)),
                   pl.BlockSpec((1, C, HW), lambda i: (i, 0, 0))),
        compiler_params=pltpu.CompilerParams(dimension_semantics=("parallel",)),
    )(x, mem, wqkv, bqkv, params["wp"], params["bp"].reshape(C, 1),
      wcz, wcv, params["bc"].reshape(C, 1), pool, up)

    return v6.reshape(B, C, H, W), attn, c3


def init_params(key, inputs_channels, dk, dv, memory_channels):
    ks = jax.random.split(key, 10)
    def w(k, o, i):
        return 0.1 * jax.random.normal(k, (o, i), jnp.float32)
    def b(k, o):
        return 0.01 * jax.random.normal(k, (o,), jnp.float32)
    return {
        "wq": w(ks[0], dk, memory_channels), "bq": b(ks[1], dk),
        "wk": w(ks[2], dk, memory_channels), "bk": b(ks[3], dk),
        "wv": w(ks[4], dv, memory_channels), "bv": b(ks[5], dv),
        "wp": w(ks[6], inputs_channels, dv), "bp": b(ks[7], inputs_channels),
        "wc": w(ks[8], inputs_channels, inputs_channels * 2),
        "bc": b(ks[9], inputs_channels),
    }


# ----------------------------------- main ------------------------------------ #

if __name__ == "__main__":
    B, C, H, W = 2, 4, 16, 16
    dk, dv = 8, 8

    key = jax.random.PRNGKey(0)
    k_in, k_mem, k_par = jax.random.split(key, 3)
    inputs = jax.random.normal(k_in, (B, C, H, W), jnp.float32)
    memory = jax.random.normal(k_mem, (B, C, H, W), jnp.float32)
    params = init_params(k_par, C, dk, dv, C)

    fwd = jax.jit(functools.partial(self_attention_forward, dk=dk, dv=dv))
    v6, attention, c3 = fwd(params, inputs, memory)
    jax.block_until_ready((v6, attention, c3))

    Np = (H // 4) * (W // 4)
    assert v6.shape == (B, C, H, W)
    assert attention.shape == (B, Np, Np)
    assert c3.shape == (B, C, C)
    assert bool(jnp.isfinite(v6).all())
    assert bool(jnp.isfinite(attention).all())
    assert bool(jnp.isfinite(c3).all())
    print("KERNEL_OK")
</pallas_src>

<mosaic_0001>
module attributes {stable_mosaic.version = 11 : i64} {
  func.func @_self_attention_kernel(%arg0: i32, %arg1: memref<1x4x256xf32, #tpu.memory_space<vmem>>, %arg2: memref<1x4x256xf32, #tpu.memory_space<vmem>>, %arg3: memref<24x4xf32, #tpu.memory_space<vmem>>, %arg4: memref<24x1xf32, #tpu.memory_space<vmem>>, %arg5: memref<4x8xf32, #tpu.memory_space<vmem>>, %arg6: memref<4x1xf32, #tpu.memory_space<vmem>>, %arg7: memref<4x4xf32, #tpu.memory_space<vmem>>, %arg8: memref<4x4xf32, #tpu.memory_space<vmem>>, %arg9: memref<4x1xf32, #tpu.memory_space<vmem>>, %arg10: memref<16x256xf32, #tpu.memory_space<vmem>>, %arg11: memref<256x16xf32, #tpu.memory_space<vmem>>, %arg12: memref<1x16x16xf32, #tpu.memory_space<vmem>>, %arg13: memref<1x4x4xf32, #tpu.memory_space<vmem>>, %arg14: memref<1x4x256xf32, #tpu.memory_space<vmem>>) attributes {dimension_semantics = [#tpu.dimension_semantics<parallel>], iteration_bounds = array<i64: 2>, scalar_prefetch = 0 : i64, scratch_operands = 0 : i64, tpu.core_type = #tpu.core_type<tc>, window_params = [{transform_indices = @transform_0, window_bounds = array<i64: 1, 4, 256>}, {transform_indices = @transform_1, window_bounds = array<i64: 1, 4, 256>}, {pipeline_mode = #tpu.pipeline_mode<synchronous>, transform_indices = @transform_2, window_bounds = array<i64: 24, 4>}, {pipeline_mode = #tpu.pipeline_mode<synchronous>, transform_indices = @transform_3, window_bounds = array<i64: 24, 1>}, {pipeline_mode = #tpu.pipeline_mode<synchronous>, transform_indices = @transform_4, window_bounds = array<i64: 4, 8>}, {pipeline_mode = #tpu.pipeline_mode<synchronous>, transform_indices = @transform_5, window_bounds = array<i64: 4, 1>}, {pipeline_mode = #tpu.pipeline_mode<synchronous>, transform_indices = @transform_6, window_bounds = array<i64: 4, 4>}, {pipeline_mode = #tpu.pipeline_mode<synchronous>, transform_indices = @transform_7, window_bounds = array<i64: 4, 4>}, {pipeline_mode = #tpu.pipeline_mode<synchronous>, transform_indices = @transform_8, window_bounds = array<i64: 4, 1>}, {pipeline_mode = #tpu.pipeline_mode<synchronous>, transform_indices = @transform_9, window_bounds = array<i64: 16, 256>}, {pipeline_mode = #tpu.pipeline_mode<synchronous>, transform_indices = @transform_10, window_bounds = array<i64: 256, 16>}, {transform_indices = @transform_11, window_bounds = array<i64: 1, 16, 16>}, {transform_indices = @transform_12, window_bounds = array<i64: 1, 4, 4>}, {transform_indices = @transform_13, window_bounds = array<i64: 1, 4, 256>}]} {
    %c0 = arith.constant 0 : index
    %c0_0 = arith.constant 0 : index
    %c0_1 = arith.constant 0 : index
    %0 = vector.load %arg1[%c0, %c0_0, %c0_1] : memref<1x4x256xf32, #tpu.memory_space<vmem>>, vector<1x4x256xf32>
    %1 = vector.shape_cast %0 : vector<1x4x256xf32> to vector<4x256xf32>
    %c0_2 = arith.constant 0 : index
    %c0_3 = arith.constant 0 : index
    %c0_4 = arith.constant 0 : index
    %2 = vector.load %arg2[%c0_2, %c0_3, %c0_4] : memref<1x4x256xf32, #tpu.memory_space<vmem>>, vector<1x4x256xf32>
    %3 = vector.shape_cast %2 : vector<1x4x256xf32> to vector<4x256xf32>
    %c0_5 = arith.constant 0 : index
    %c0_6 = arith.constant 0 : index
    %4 = vector.load %arg10[%c0_5, %c0_6] : memref<16x256xf32, #tpu.memory_space<vmem>>, vector<16x256xf32>
    %cst = arith.constant dense<0.000000e+00> : vector<4x16xf32>
    %5 = tpu.matmul %3, %4, %cst {dimension_numbers = #tpu.dot_dimension_numbers<[1], [1], [0], [0], [0, 0, 1, 0], [], []>} : vector<4x256xf32>, vector<16x256xf32>, vector<4x16xf32> -> vector<4x16xf32>
    %c0_7 = arith.constant 0 : index
    %c0_8 = arith.constant 0 : index
    %6 = vector.load %arg3[%c0_7, %c0_8] : memref<24x4xf32, #tpu.memory_space<vmem>>, vector<24x4xf32>
    %7 = arith.truncf %6 : vector<24x4xf32> to vector<24x4xbf16>
    %8 = arith.truncf %5 : vector<4x16xf32> to vector<4x16xbf16>
    %cst_9 = arith.constant dense<0.000000e+00> : vector<24x16xf32>
    %9 = tpu.matmul %7, %8, %cst_9 {dimension_numbers = #tpu.dot_dimension_numbers<[1], [0], [0], [1], [0, 0, 1, 1], [], []>} : vector<24x4xbf16>, vector<4x16xbf16>, vector<24x16xf32> -> vector<24x16xf32>
    %c0_10 = arith.constant 0 : index
    %c0_11 = arith.constant 0 : index
    %10 = vector.load %arg4[%c0_10, %c0_11] : memref<24x1xf32, #tpu.memory_space<vmem>>, vector<24x1xf32>
    %11 = vector.broadcast %10 : vector<24x1xf32> to vector<24x16xf32>
    %12 = arith.addf %9, %11 : vector<24x16xf32>
    %13 = vector.extract_strided_slice %12 {offsets = [0, 0], sizes = [8, 16], strides = [1, 1]} : vector<24x16xf32> to vector<8x16xf32>
    %cst_12 = arith.constant 0.353553385 : f32
    %14 = vector.broadcast %cst_12 : f32 to vector<8x16xf32>
    %15 = arith.mulf %13, %14 : vector<8x16xf32>
    %16 = vector.extract_strided_slice %12 {offsets = [8, 0], sizes = [8, 16], strides = [1, 1]} : vector<24x16xf32> to vector<8x16xf32>
    %17 = vector.extract_strided_slice %12 {offsets = [16, 0], sizes = [8, 16], strides = [1, 1]} : vector<24x16xf32> to vector<8x16xf32>
    %18 = arith.truncf %15 : vector<8x16xf32> to vector<8x16xbf16>
    %19 = arith.truncf %16 : vector<8x16xf32> to vector<8x16xbf16>
    %cst_13 = arith.constant dense<0.000000e+00> : vector<16x16xf32>
    %20 = tpu.matmul %18, %19, %cst_13 {dimension_numbers = #tpu.dot_dimension_numbers<[0], [0], [1], [1], [0, 1, 1, 1], [], []>} : vector<8x16xbf16>, vector<8x16xbf16>, vector<16x16xf32> -> vector<16x16xf32>
    %cst_14 = arith.constant dense<0xFF800000> : vector<16xf32>
    %21 = vector.multi_reduction <maximumf>, %20, %cst_14 [1] : vector<16x16xf32> to vector<16xf32>
    %22 = vector.shape_cast %21 : vector<16xf32> to vector<16x1xf32>
    %23 = vector.broadcast %22 : vector<16x1xf32> to vector<16x16xf32>
    %24 = arith.subf %20, %23 : vector<16x16xf32>
    %25 = math.exp %24 : vector<16x16xf32>
    %cst_15 = arith.constant dense<0.000000e+00> : vector<16xf32>
    %26 = vector.multi_reduction <add>, %25, %cst_15 [1] : vector<16x16xf32> to vector<16xf32>
    %27 = vector.shape_cast %26 : vector<16xf32> to vector<16x1xf32>
    %28 = tpu.reciprocal %27 {approx = true} : vector<16x1xf32> -> vector<16x1xf32>
    %29 = vector.broadcast %28 : vector<16x1xf32> to vector<16x16xf32>
    %30 = arith.mulf %25, %29 : vector<16x16xf32>
    %c0_16 = arith.constant 0 : index
    %c0_17 = arith.constant 0 : index
    %c0_18 = arith.constant 0 : index
    %31 = vector.load %arg12[%c0_16, %c0_17, %c0_18] : memref<1x16x16xf32, #tpu.memory_space<vmem>>, vector<1x16x16xf32>
    %32 = vector.shape_cast %31 : vector<1x16x16xf32> to vector<16x16xf32>
    %33 = vector.shape_cast %30 : vector<16x16xf32> to vector<1x16x16xf32>
    tpu.vector_store %arg12[%c0_16, %c0_17, %c0_18], %33 {strides = array<i32>} : memref<1x16x16xf32, #tpu.memory_space<vmem>>, vector<1x16x16xf32>,
    %34 = arith.truncf %17 : vector<8x16xf32> to vector<8x16xbf16>
    %35 = arith.truncf %30 : vector<16x16xf32> to vector<16x16xbf16>
    %cst_19 = arith.constant dense<0.000000e+00> : vector<8x16xf32>
    %36 = tpu.matmul %34, %35, %cst_19 {dimension_numbers = #tpu.dot_dimension_numbers<[1], [1], [0], [0], [0, 0, 1, 0], [], []>} : vector<8x16xbf16>, vector<16x16xbf16>, vector<8x16xf32> -> vector<8x16xf32>
    %c0_20 = arith.constant 0 : index
    %c0_21 = arith.constant 0 : index
    %37 = vector.load %arg5[%c0_20, %c0_21] : memref<4x8xf32, #tpu.memory_space<vmem>>, vector<4x8xf32>
    %38 = arith.truncf %37 : vector<4x8xf32> to vector<4x8xbf16>
    %39 = arith.truncf %36 : vector<8x16xf32> to vector<8x16xbf16>
    %cst_22 = arith.constant dense<0.000000e+00> : vector<4x16xf32>
    %40 = tpu.matmul %38, %39, %cst_22 {dimension_numbers = #tpu.dot_dimension_numbers<[1], [0], [0], [1], [0, 0, 1, 1], [], []>} : vector<4x8xbf16>, vector<8x16xbf16>, vector<4x16xf32> -> vector<4x16xf32>
    %c0_23 = arith.constant 0 : index
    %c0_24 = arith.constant 0 : index
    %41 = vector.load %arg6[%c0_23, %c0_24] : memref<4x1xf32, #tpu.memory_space<vmem>>, vector<4x1xf32>
    %42 = vector.broadcast %41 : vector<4x1xf32> to vector<4x16xf32>
    %43 = arith.addf %40, %42 : vector<4x16xf32>
    %c0_25 = arith.constant 0 : index
    %c0_26 = arith.constant 0 : index
    %44 = vector.load %arg11[%c0_25, %c0_26] : memref<256x16xf32, #tpu.memory_space<vmem>>, vector<256x16xf32>
    %cst_27 = arith.constant dense<0.000000e+00> : vector<4x256xf32>
    %45 = tpu.matmul %43, %44, %cst_27 {dimension_numbers = #tpu.dot_dimension_numbers<[1], [1], [0], [0], [0, 0, 1, 0], [], []>} : vector<4x16xf32>, vector<256x16xf32>, vector<4x256xf32> -> vector<4x256xf32>
    %46 = arith.truncf %1 : vector<4x256xf32> to vector<4x256xbf16>
    %cst_28 = arith.constant dense<0.000000e+00> : vector<4x4xf32>
    %47 = tpu.matmul %46, %46, %cst_28 {dimension_numbers = #tpu.dot_dimension_numbers<[1], [1], [0], [0], [0, 0, 1, 0], [], []>} : vector<4x256xbf16>, vector<4x256xbf16>, vector<4x4xf32> -> vector<4x4xf32>
    %cst_29 = arith.constant 6.250000e-02 : f32
    %48 = vector.broadcast %cst_29 : f32 to vector<4x4xf32>
    %49 = arith.mulf %47, %48 : vector<4x4xf32>
    %cst_30 = arith.constant dense<0xFF800000> : vector<4xf32>
    %50 = vector.multi_reduction <maximumf>, %49, %cst_30 [1] : vector<4x4xf32> to vector<4xf32>
    %51 = vector.shape_cast %50 : vector<4xf32> to vector<4x1xf32>
    %52 = vector.broadcast %51 : vector<4x1xf32> to vector<4x4xf32>
    %53 = arith.subf %49, %52 : vector<4x4xf32>
    %54 = math.exp %53 : vector<4x4xf32>
    %cst_31 = arith.constant dense<0.000000e+00> : vector<4xf32>
    %55 = vector.multi_reduction <add>, %54, %cst_31 [1] : vector<4x4xf32> to vector<4xf32>
    %56 = vector.shape_cast %55 : vector<4xf32> to vector<4x1xf32>
    %57 = tpu.reciprocal %56 {approx = true} : vector<4x1xf32> -> vector<4x1xf32>
    %58 = vector.broadcast %57 : vector<4x1xf32> to vector<4x4xf32>
    %59 = arith.mulf %54, %58 : vector<4x4xf32>
    %c0_32 = arith.constant 0 : index
    %c0_33 = arith.constant 0 : index
    %c0_34 = arith.constant 0 : index
    %60 = vector.load %arg13[%c0_32, %c0_33, %c0_34] : memref<1x4x4xf32, #tpu.memory_space<vmem>>, vector<1x4x4xf32>
    %61 = vector.shape_cast %60 : vector<1x4x4xf32> to vector<4x4xf32>
    %62 = vector.shape_cast %59 : vector<4x4xf32> to vector<1x4x4xf32>
    tpu.vector_store %arg13[%c0_32, %c0_33, %c0_34], %62 {strides = array<i32>} : memref<1x4x4xf32, #tpu.memory_space<vmem>>, vector<1x4x4xf32>,
    %63 = arith.truncf %59 : vector<4x4xf32> to vector<4x4xbf16>
    %cst_35 = arith.constant dense<0.000000e+00> : vector<4x256xf32>
    %64 = tpu.matmul %63, %46, %cst_35 {dimension_numbers = #tpu.dot_dimension_numbers<[1], [0], [0], [1], [0, 0, 1, 1], [], []>} : vector<4x4xbf16>, vector<4x256xbf16>, vector<4x256xf32> -> vector<4x256xf32>
    %65 = arith.addf %45, %1 : vector<4x256xf32>
    %66 = arith.addf %64, %1 : vector<4x256xf32>
    %c0_36 = arith.constant 0 : index
    %c0_37 = arith.constant 0 : index
    %67 = vector.load %arg7[%c0_36, %c0_37] : memref<4x4xf32, #tpu.memory_space<vmem>>, vector<4x4xf32>
    %68 = arith.truncf %67 : vector<4x4xf32> to vector<4x4xbf16>
    %69 = arith.truncf %65 : vector<4x256xf32> to vector<4x256xbf16>
    %cst_38 = arith.constant dense<0.000000e+00> : vector<4x256xf32>
    %70 = tpu.matmul %68, %69, %cst_38 {dimension_numbers = #tpu.dot_dimension_numbers<[1], [0], [0], [1], [0, 0, 1, 1], [], []>} : vector<4x4xbf16>, vector<4x256xbf16>, vector<4x256xf32> -> vector<4x256xf32>
    %c0_39 = arith.constant 0 : index
    %c0_40 = arith.constant 0 : index
    %71 = vector.load %arg8[%c0_39, %c0_40] : memref<4x4xf32, #tpu.memory_space<vmem>>, vector<4x4xf32>
    %72 = arith.truncf %71 : vector<4x4xf32> to vector<4x4xbf16>
    %73 = arith.truncf %66 : vector<4x256xf32> to vector<4x256xbf16>
    %cst_41 = arith.constant dense<0.000000e+00> : vector<4x256xf32>
    %74 = tpu.matmul %72, %73, %cst_41 {dimension_numbers = #tpu.dot_dimension_numbers<[1], [0], [0], [1], [0, 0, 1, 1], [], []>} : vector<4x4xbf16>, vector<4x256xbf16>, vector<4x256xf32> -> vector<4x256xf32>
    %75 = arith.addf %70, %74 : vector<4x256xf32>
    %c0_42 = arith.constant 0 : index
    %c0_43 = arith.constant 0 : index
    %76 = vector.load %arg9[%c0_42, %c0_43] : memref<4x1xf32, #tpu.memory_space<vmem>>, vector<4x1xf32>
    %77 = vector.broadcast %76 : vector<4x1xf32> to vector<4x256xf32>
    %78 = arith.addf %75, %77 : vector<4x256xf32>
    %c0_44 = arith.constant 0 : index
    %c0_45 = arith.constant 0 : index
    %c0_46 = arith.constant 0 : index
    %79 = vector.load %arg14[%c0_44, %c0_45, %c0_46] : memref<1x4x256xf32, #tpu.memory_space<vmem>>, vector<1x4x256xf32>
    %80 = vector.shape_cast %79 : vector<1x4x256xf32> to vector<4x256xf32>
    %81 = vector.shape_cast %78 : vector<4x256xf32> to vector<1x4x256xf32>
    tpu.vector_store %arg14[%c0_44, %c0_45, %c0_46], %81 {strides = array<i32>} : memref<1x4x256xf32, #tpu.memory_space<vmem>>, vector<1x4x256xf32>,
    return
  }
  func.func @transform_0(%arg0: i32) -> (i32, i32, i32) {
    %c0_i32 = arith.constant 0 : i32
    %c0_i32_0 = arith.constant 0 : i32
    %c0_i32_1 = arith.constant 0 : i32
    return %arg0, %c0_i32, %c0_i32_0 : i32, i32, i32
  }
  func.func @transform_1(%arg0: i32) -> (i32, i32, i32) {
    %c0_i32 = arith.constant 0 : i32
    %c0_i32_0 = arith.constant 0 : i32
    %c0_i32_1 = arith.constant 0 : i32
    return %arg0, %c0_i32, %c0_i32_0 : i32, i32, i32
  }
  func.func @transform_2(%arg0: i32) -> (i32, i32) {
    %c0_i32 = arith.constant 0 : i32
    %c0_i32_0 = arith.constant 0 : i32
    %c0_i32_1 = arith.constant 0 : i32
    return %c0_i32, %c0_i32_0 : i32, i32
  }
  func.func @transform_3(%arg0: i32) -> (i32, i32) {
    %c0_i32 = arith.constant 0 : i32
    %c0_i32_0 = arith.constant 0 : i32
    %c0_i32_1 = arith.constant 0 : i32
    return %c0_i32, %c0_i32_0 : i32, i32
  }
  func.func @transform_4(%arg0: i32) -> (i32, i32) {
    %c0_i32 = arith.constant 0 : i32
    %c0_i32_0 = arith.constant 0 : i32
    %c0_i32_1 = arith.constant 0 : i32
    return %c0_i32, %c0_i32_0 : i32, i32
  }
  func.func @transform_5(%arg0: i32) -> (i32, i32) {
    %c0_i32 = arith.constant 0 : i32
    %c0_i32_0 = arith.constant 0 : i32
    %c0_i32_1 = arith.constant 0 : i32
    return %c0_i32, %c0_i32_0 : i32, i32
  }
  func.func @transform_6(%arg0: i32) -> (i32, i32) {
    %c0_i32 = arith.constant 0 : i32
    %c0_i32_0 = arith.constant 0 : i32
    %c0_i32_1 = arith.constant 0 : i32
    return %c0_i32, %c0_i32_0 : i32, i32
  }
  func.func @transform_7(%arg0: i32) -> (i32, i32) {
    %c0_i32 = arith.constant 0 : i32
    %c0_i32_0 = arith.constant 0 : i32
    %c0_i32_1 = arith.constant 0 : i32
    return %c0_i32, %c0_i32_0 : i32, i32
  }
  func.func @transform_8(%arg0: i32) -> (i32, i32) {
    %c0_i32 = arith.constant 0 : i32
    %c0_i32_0 = arith.constant 0 : i32
    %c0_i32_1 = arith.constant 0 : i32
    return %c0_i32, %c0_i32_0 : i32, i32
  }
  func.func @transform_9(%arg0: i32) -> (i32, i32) {
    %c0_i32 = arith.constant 0 : i32
    %c0_i32_0 = arith.constant 0 : i32
    %c0_i32_1 = arith.constant 0 : i32
    return %c0_i32, %c0_i32_0 : i32, i32
  }
  func.func @transform_10(%arg0: i32) -> (i32, i32) {
    %c0_i32 = arith.constant 0 : i32
    %c0_i32_0 = arith.constant 0 : i32
    %c0_i32_1 = arith.constant 0 : i32
    return %c0_i32, %c0_i32_0 : i32, i32
  }
  func.func @transform_11(%arg0: i32) -> (i32, i32, i32) {
    %c0_i32 = arith.constant 0 : i32
    %c0_i32_0 = arith.constant 0 : i32
    %c0_i32_1 = arith.constant 0 : i32
    return %arg0, %c0_i32, %c0_i32_0 : i32, i32, i32
  }
  func.func @transform_12(%arg0: i32) -> (i32, i32, i32) {
    %c0_i32 = arith.constant 0 : i32
    %c0_i32_0 = arith.constant 0 : i32
    %c0_i32_1 = arith.constant 0 : i32
    return %arg0, %c0_i32, %c0_i32_0 : i32, i32, i32
  }
  func.func @transform_13(%arg0: i32) -> (i32, i32, i32) {
    %c0_i32 = arith.constant 0 : i32
    %c0_i32_0 = arith.constant 0 : i32
    %c0_i32_1 = arith.constant 0 : i32
    return %arg0, %c0_i32, %c0_i32_0 : i32, i32, i32
  }
}

</mosaic_0001>

<llo_original>
// kernel: self_attention_forward.1
$region0: #{self_attention_forward.1}
  #allocation0 [shape = 'u32[]', space=smem, size = 0x4, offset = 0x4, fixed_abs, tag = 'smem constant byte address 0x4 - core index']
  #allocation1 [shape = 'u32[144,128]{1,0:T(1,128)}', space=vmem, size = 0x12000, scoped, tag = 'internal scratch']
  %s0 = inlined_call_operand.vmem [shape: f32[2,4,256], index: 0, kind: input, shape index: {}]
  %s1 = inlined_call_operand.vmem [shape: f32[2,4,256], index: 1, kind: input, shape index: {}]
  %s2 = inlined_call_operand.vmem [shape: f32[24,4], index: 2, kind: input, shape index: {}]
  %s3 = inlined_call_operand.vmem [shape: f32[24,1], index: 3, kind: input, shape index: {}]
  %s4 = inlined_call_operand.vmem [shape: f32[4,8], index: 4, kind: input, shape index: {}]
  %s5 = inlined_call_operand.vmem [shape: f32[4,1], index: 5, kind: input, shape index: {}]
  %s6 = inlined_call_operand.vmem [shape: f32[4,4], index: 6, kind: input, shape index: {}]
  %s7 = inlined_call_operand.vmem [shape: f32[4,4], index: 7, kind: input, shape index: {}]
  %s8 = inlined_call_operand.vmem [shape: f32[4,1], index: 8, kind: input, shape index: {}]
  %s9 = inlined_call_operand.vmem [shape: f32[16,256], index: 9, kind: input, shape index: {}]
  %s10 = inlined_call_operand.vmem [shape: f32[256,16], index: 10, kind: input, shape index: {}]
  %s11 = inlined_call_operand.hbm [shape: f32[2,16,16], index: 11, kind: output, shape index: {0}]
  %s12 = inlined_call_operand.hbm [shape: f32[2,4,4], index: 12, kind: output, shape index: {1}]
  %s13 = inlined_call_operand.vmem [shape: f32[2,4,256], index: 13, kind: output, shape index: {2}]
  %14 = xla_tuple %s11, %s12, %s13
  %s15 = sld [smem:[#allocation0]]
  $region93: #{self_attention_forward.1} parent=0
    _
  %s17 = ssub.s32 1, %s15
  %s18 = scalar_select 0, %s17, %s15
  $region1: #{self_attention_forward.1} parent=0
    #allocation2 [shape = 'u8[16384]{0}', space=vmem, size = 0x4000, scoped, tag = 'output window, operand 0']
    #allocation3 [shape = 's32[2]{0}', space=sflag, size = 0x8, scoped, tag = 'scoped memory for self_attention_forward.1']
    #allocation4 [shape = 'u8[4096]{0}', space=vmem, size = 0x1000, scoped, tag = 'output window, operand 1']
    #allocation5 [shape = 's32[2]{0}', space=sflag, size = 0x8, scoped, tag = 'scoped memory for self_attention_forward.1']
    %19 = vsyncpa [#allocation3], 0
    %s20 = scalar_lea.sflag [#allocation3], 1
    %21 = vsyncpa %s20, 0
    %22 = vsyncpa [#allocation5], 0
    %s23 = scalar_lea.sflag [#allocation5], 1
    %24 = vsyncpa %s23, 0
    loop: start=0, step=1, limit=4
    $region2: #{self_attention_forward.1} parent=1 // loop_pre_header
      _
    $region3: #{self_attention_forward.1} parent=1 // loop_header
      %s26 = sphi 0, %s30
      %p27 = scmp.ge.s32.totalorder %s26, 4
      %s36 = sphi 0, %s38
      %s39 = sphi 0, %s36
      %s40 = sphi 0, %s39
      %s56 = sphi 0, %s40
      %s62 = sphi 0, %s64
      %s65 = sphi 0, %s62
      %s66 = sphi 0, %s65
      %s82 = sphi 0, %s66
      %s86 = sphi 0, %s86
      %s88 = sphi 0, %s86
      %s89 = sphi 0, %s88
      %s103 = sphi 0, %s89
      %s107 = sphi 0, %s107
      %s109 = sphi 0, %s107
      %s110 = sphi 0, %s109
      %s124 = sphi 0, %s110
      %s128 = sphi 0, %s128
      %s130 = sphi 0, %s128
      %s131 = sphi 0, %s130
      %s145 = sphi 0, %s131
      %s149 = sphi 0, %s149
      %s151 = sphi 0, %s149
      %s152 = sphi 0, %s151
      %s166 = sphi 0, %s152
      %s170 = sphi 0, %s170
      %s172 = sphi 0, %s170
      %s173 = sphi 0, %s172
      %s187 = sphi 0, %s173
      %s191 = sphi 0, %s191
      %s193 = sphi 0, %s191
      %s194 = sphi 0, %s193
      %s208 = sphi 0, %s194
      %s212 = sphi 0, %s212
      %s214 = sphi 0, %s212
      %s215 = sphi 0, %s214
      %s229 = sphi 0, %s215
      %s233 = sphi 0, %s233
      %s235 = sphi 0, %s233
      %s236 = sphi 0, %s235
      %s250 = sphi 0, %s236
      %s254 = sphi 0, %s254
      %s256 = sphi 0, %s254
      %s257 = sphi 0, %s256
      %s271 = sphi 0, %s257
      %s277 = sphi 0, %s279
      %s280 = sphi 0, %s277
      %s281 = sphi 0, %s280
      %s297 = sphi 0, %s281
      %s303 = sphi 0, %s305
      %s306 = sphi 0, %s303
      %s307 = sphi 0, %s306
      %s323 = sphi 0, %s307
      %s329 = sphi 0, %s331
      %s332 = sphi 0, %s329
      %s333 = sphi 0, %s332
      %s349 = sphi 0, %s333
    $region4: #{self_attention_forward.1} parent=1 // loop_header_branch
      %29 = sbr.rel (%p27) target = $region8
    $region5: #{self_attention_forward.1} parent=1 // loop_body
      %s31 = ssub.s32 %s26, 1
      %s32 = ssub.s32 %s26, 2
      %s33 = sadd.s32 %s26, 1
      %s34 = ssub.s32 %s26, %s33
      %p35 = scmp.eq.s32.totalorder %s34, 0
      %s37 = sadd.s32 %s36, 1
      %s38 = scalar_select %p35, %s36, %s37
      %p41 = pneg %p35
      %p42 = scmp.eq.s32.totalorder %s26, 1
      %p43 = por %p41, %p42
      %p44 = scmp.ne.s32.totalorder %s36, %s39
      %p45 = scmp.eq.s32.totalorder %s26, 0
      %p46 = por %p44, %p45
      %p47 = scmp.ne.s32.totalorder %s36, %s39
      %p48 = scmp.eq.s32.totalorder %s31, 1
      %p49 = por %p47, %p48
      %p50 = scmp.ne.s32.totalorder %s39, %s40
      %p51 = scmp.eq.s32.totalorder %s31, 0
      %p52 = por %p50, %p51
      %p53 = scmp.ne.s32.totalorder %s39, %s40
      %p54 = scmp.eq.s32.totalorder %s32, 1
      %p55 = por %p53, %p54
      %p57 = scmp.ne.s32.totalorder %s40, %s56
      %p58 = scmp.eq.s32.totalorder %s32, 0
      %p59 = por %p57, %p58
      %s60 = ssub.s32 %s26, %s33
      %p61 = scmp.eq.s32.totalorder %s60, 0
      %s63 = sadd.s32 %s62, 1
      %s64 = scalar_select %p61, %s62, %s63
      %p67 = pneg %p61
      %p68 = scmp.eq.s32.totalorder %s26, 1
      %p69 = por %p67, %p68
      %p70 = scmp.ne.s32.totalorder %s62, %s65
      %p71 = scmp.eq.s32.totalorder %s26, 0
      %p72 = por %p70, %p71
      %p73 = scmp.ne.s32.totalorder %s62, %s65
      %p74 = scmp.eq.s32.totalorder %s31, 1
      %p75 = por %p73, %p74
      %p76 = scmp.ne.s32.totalorder %s65, %s66
      %p77 = scmp.eq.s32.totalorder %s31, 0
      %p78 = por %p76, %p77
      %p79 = scmp.ne.s32.totalorder %s65, %s66
      %p80 = scmp.eq.s32.totalorder %s32, 1
      %p81 = por %p79, %p80
      %p83 = scmp.ne.s32.totalorder %s66, %s82
      %p84 = scmp.eq.s32.totalorder %s32, 0
      %p85 = por %p83, %p84
      %s87 = sadd.s32 %s86, 1
      %p90 = scmp.eq.s32.totalorder %s26, 1
      %p91 = scmp.ne.s32.totalorder %s86, %s88
      %p92 = scmp.eq.s32.totalorder %s26, 0
      %p93 = por %p91, %p92
      %p94 = scmp.ne.s32.totalorder %s86, %s88
      %p95 = scmp.eq.s32.totalorder %s31, 1
      %p96 = por %p94, %p95
      %p97 = scmp.ne.s32.totalorder %s88, %s89
      %p98 = scmp.eq.s32.totalorder %s31, 0
      %p99 = por %p97, %p98
      %p100 = scmp.ne.s32.totalorder %s88, %s89
      %p101 = scmp.eq.s32.totalorder %s32, 1
      %p102 = por %p100, %p101
      %p104 = scmp.ne.s32.totalorder %s89, %s103
      %p105 = scmp.eq.s32.totalorder %s32, 0
      %p106 = por %p104, %p105
      %s108 = sadd.s32 %s107, 1
      %p111 = scmp.eq.s32.totalorder %s26, 1
      %p112 = scmp.ne.s32.totalorder %s107, %s109
      %p113 = scmp.eq.s32.totalorder %s26, 0
      %p114 = por %p112, %p113
      %p115 = scmp.ne.s32.totalorder %s107, %s109
      %p116 = scmp.eq.s32.totalorder %s31, 1
      %p117 = por %p115, %p116
      %p118 = scmp.ne.s32.totalorder %s109, %s110
      %p119 = scmp.eq.s32.totalorder %s31, 0
      %p120 = por %p118, %p119
      %p121 = scmp.ne.s32.totalorder %s109, %s110
      %p122 = scmp.eq.s32.totalorder %s32, 1
      %p123 = por %p121, %p122
      %p125 = scmp.ne.s32.totalorder %s110, %s124
      %p126 = scmp.eq.s32.totalorder %s32, 0
      %p127 = por %p125, %p126
      %s129 = sadd.s32 %s128, 1
      %p132 = scmp.eq.s32.totalorder %s26, 1
      %p133 = scmp.ne.s32.totalorder %s128, %s130
      %p134 = scmp.eq.s32.totalorder %s26, 0
      %p135 = por %p133, %p134
      %p136 = scmp.ne.s32.totalorder %s128, %s130
      %p137 = scmp.eq.s32.totalorder %s31, 1
      %p138 = por %p136, %p137
      %p139 = scmp.ne.s32.totalorder %s130, %s131
      %p140 = scmp.eq.s32.totalorder %s31, 0
      %p141 = por %p139, %p140
      %p142 = scmp.ne.s32.totalorder %s130, %s131
      %p143 = scmp.eq.s32.totalorder %s32, 1
      %p144 = por %p142, %p143
      %p146 = scmp.ne.s32.totalorder %s131, %s145
      %p147 = scmp.eq.s32.totalorder %s32, 0
      %p148 = por %p146, %p147
      %s150 = sadd.s32 %s149, 1
      %p153 = scmp.eq.s32.totalorder %s26, 1
      %p154 = scmp.ne.s32.totalorder %s149, %s151
      %p155 = scmp.eq.s32.totalorder %s26, 0
      %p156 = por %p154, %p155
      %p157 = scmp.ne.s32.totalorder %s149, %s151
      %p158 = scmp.eq.s32.totalorder %s31, 1
      %p159 = por %p157, %p158
      %p160 = scmp.ne.s32.totalorder %s151, %s152
      %p161 = scmp.eq.s32.totalorder %s31, 0
      %p162 = por %p160, %p161
      %p163 = scmp.ne.s32.totalorder %s151, %s152
      %p164 = scmp.eq.s32.totalorder %s32, 1
      %p165 = por %p163, %p164
      %p167 = scmp.ne.s32.totalorder %s152, %s166
      %p168 = scmp.eq.s32.totalorder %s32, 0
      %p169 = por %p167, %p168
      %s171 = sadd.s32 %s170, 1
      %p174 = scmp.eq.s32.totalorder %s26, 1
      %p175 = scmp.ne.s32.totalorder %s170, %s172
      %p176 = scmp.eq.s32.totalorder %s26, 0
      %p177 = por %p175, %p176
      %p178 = scmp.ne.s32.totalorder %s170, %s172
      %p179 = scmp.eq.s32.totalorder %s31, 1
      %p180 = por %p178, %p179
      %p181 = scmp.ne.s32.totalorder %s172, %s173
      %p182 = scmp.eq.s32.totalorder %s31, 0
      %p183 = por %p181, %p182
      %p184 = scmp.ne.s32.totalorder %s172, %s173
      %p185 = scmp.eq.s32.totalorder %s32, 1
      %p186 = por %p184, %p185
      %p188 = scmp.ne.s32.totalorder %s173, %s187
      %p189 = scmp.eq.s32.totalorder %s32, 0
      %p190 = por %p188, %p189
      %s192 = sadd.s32 %s191, 1
      %p195 = scmp.eq.s32.totalorder %s26, 1
      %p196 = scmp.ne.s32.totalorder %s191, %s193
      %p197 = scmp.eq.s32.totalorder %s26, 0
      %p198 = por %p196, %p197
      %p199 = scmp.ne.s32.totalorder %s191, %s193
      %p200 = scmp.eq.s32.totalorder %s31, 1
      %p201 = por %p199, %p200
      %p202 = scmp.ne.s32.totalorder %s193, %s194
      %p203 = scmp.eq.s32.totalorder %s31, 0
      %p204 = por %p202, %p203
      %p205 = scmp.ne.s32.totalorder %s193, %s194
      %p206 = scmp.eq.s32.totalorder %s32, 1
      %p207 = por %p205, %p206
      %p209 = scmp.ne.s32.totalorder %s194, %s208
      %p210 = scmp.eq.s32.totalorder %s32, 0
      %p211 = por %p209, %p210
      %s213 = sadd.s32 %s212, 1
      %p216 = scmp.eq.s32.totalorder %s26, 1
      %p217 = scmp.ne.s32.totalorder %s212, %s214
      %p218 = scmp.eq.s32.totalorder %s26, 0
      %p219 = por %p217, %p218
      %p220 = scmp.ne.s32.totalorder %s212, %s214
      %p221 = scmp.eq.s32.totalorder %s31, 1
      %p222 = por %p220, %p221
      %p223 = scmp.ne.s32.totalorder %s214, %s215
      %p224 = scmp.eq.s32.totalorder %s31, 0
      %p225 = por %p223, %p224
      %p226 = scmp.ne.s32.totalorder %s214, %s215
      %p227 = scmp.eq.s32.totalorder %s32, 1
      %p228 = por %p226, %p227
      %p230 = scmp.ne.s32.totalorder %s215, %s229
      %p231 = scmp.eq.s32.totalorder %s32, 0
      %p232 = por %p230, %p231
      %s234 = sadd.s32 %s233, 1
      %p237 = scmp.eq.s32.totalorder %s26, 1
      %p238 = scmp.ne.s32.totalorder %s233, %s235
      %p239 = scmp.eq.s32.totalorder %s26, 0
      %p240 = por %p238, %p239
      %p241 = scmp.ne.s32.totalorder %s233, %s235
      %p242 = scmp.eq.s32.totalorder %s31, 1
      %p243 = por %p241, %p242
      %p244 = scmp.ne.s32.totalorder %s235, %s236
      %p245 = scmp.eq.s32.totalorder %s31, 0
      %p246 = por %p244, %p245
      %p247 = scmp.ne.s32.totalorder %s235, %s236
      %p248 = scmp.eq.s32.totalorder %s32, 1
      %p249 = por %p247, %p248
      %p251 = scmp.ne.s32.totalorder %s236, %s250
      %p252 = scmp.eq.s32.totalorder %s32, 0
      %p253 = por %p251, %p252
      %s255 = sadd.s32 %s254, 1
      %p258 = scmp.eq.s32.totalorder %s26, 1
      %p259 = scmp.ne.s32.totalorder %s254, %s256
      %p260 = scmp.eq.s32.totalorder %s26, 0
      %p261 = por %p259, %p260
      %p262 = scmp.ne.s32.totalorder %s254, %s256
      %p263 = scmp.eq.s32.totalorder %s31, 1
      %p264 = por %p262, %p263
      %p265 = scmp.ne.s32.totalorder %s256, %s257
      %p266 = scmp.eq.s32.totalorder %s31, 0
      %p267 = por %p265, %p266
      %p268 = scmp.ne.s32.totalorder %s256, %s257
      %p269 = scmp.eq.s32.totalorder %s32, 1
      %p270 = por %p268, %p269
      %p272 = scmp.ne.s32.totalorder %s257, %s271
      %p273 = scmp.eq.s32.totalorder %s32, 0
      %p274 = por %p272, %p273
      %s275 = ssub.s32 %s26, %s33
      %p276 = scmp.eq.s32.totalorder %s275, 0
      %s278 = sadd.s32 %s277, 1
      %s279 = scalar_select %p276, %s277, %s278
      %p282 = pneg %p276
      %p283 = scmp.eq.s32.totalorder %s26, 1
      %p284 = por %p282, %p283
      %p285 = scmp.ne.s32.totalorder %s277, %s280
      %p286 = scmp.eq.s32.totalorder %s26, 0
      %p287 = por %p285, %p286
      %p288 = scmp.ne.s32.totalorder %s277, %s280
      %p289 = scmp.eq.s32.totalorder %s31, 1
      %p290 = por %p288, %p289
      %p291 = scmp.ne.s32.totalorder %s280, %s281
      %p292 = scmp.eq.s32.totalorder %s31, 0
      %p293 = por %p291, %p292
      %p294 = scmp.ne.s32.totalorder %s280, %s281
      %p295 = scmp.eq.s32.totalorder %s32, 1
      %p296 = por %p294, %p295
      %p298 = scmp.ne.s32.totalorder %s281, %s297
      %p299 = scmp.eq.s32.totalorder %s32, 0
      %p300 = por %p298, %p299
      %s301 = ssub.s32 %s26, %s33
      %p302 = scmp.eq.s32.totalorder %s301, 0
      %s304 = sadd.s32 %s303, 1
      %s305 = scalar_select %p302, %s303, %s304
      %p308 = pneg %p302
      %p309 = scmp.eq.s32.totalorder %s26, 1
      %p310 = por %p308, %p309
      %p311 = scmp.ne.s32.totalorder %s303, %s306
      %p312 = scmp.eq.s32.totalorder %s26, 0
      %p313 = por %p311, %p312
      %p314 = scmp.ne.s32.totalorder %s303, %s306
      %p315 = scmp.eq.s32.totalorder %s31, 1
      %p316 = por %p314, %p315
      %p317 = scmp.ne.s32.totalorder %s306, %s307
      %p318 = scmp.eq.s32.totalorder %s31, 0
      %p319 = por %p317, %p318
      %p320 = scmp.ne.s32.totalorder %s306, %s307
      %p321 = scmp.eq.s32.totalorder %s32, 1
      %p322 = por %p320, %p321
      %p324 = scmp.ne.s32.totalorder %s307, %s323
      %p325 = scmp.eq.s32.totalorder %s32, 0
      %p326 = por %p324, %p325
      %s327 = ssub.s32 %s26, %s33
      %p328 = scmp.eq.s32.totalorder %s327, 0
      %s330 = sadd.s32 %s329, 1
      %s331 = scalar_select %p328, %s329, %s330
      %p334 = pneg %p328
      %p335 = scmp.eq.s32.totalorder %s26, 1
      %p336 = por %p334, %p335
      %p337 = scmp.ne.s32.totalorder %s329, %s332
      %p338 = scmp.eq.s32.totalorder %s26, 0
      %p339 = por %p337, %p338
      %p340 = scmp.ne.s32.totalorder %s329, %s332
      %p341 = scmp.eq.s32.totalorder %s31, 1
      %p342 = por %p340, %p341
      %p343 = scmp.ne.s32.totalorder %s332, %s333
      %p344 = scmp.eq.s32.totalorder %s31, 0
      %p345 = por %p343, %p344
      %p346 = scmp.ne.s32.totalorder %s332, %s333
      %p347 = scmp.eq.s32.totalorder %s32, 1
      %p348 = por %p346, %p347
      %p350 = scmp.ne.s32.totalorder %s333, %s349
      %p351 = scmp.eq.s32.totalorder %s32, 0
      %p352 = por %p350, %p351
      %p353 = scmp.le.s32.totalorder 1, %s26
      %p354 = scmp.lt.s32.totalorder %s26, 3
      %p355 = pnand %p353, %p354
      %p356 = pneg %p355
      // Predicated region
      $region9: #{self_attention_forward.1} parent=5 // pred_check
        _
      $region10: #{self_attention_forward.1} parent=5 // pred_check_branch
        %358 = sbr.rel (%p355) target = $region12
      $region11: #{self_attention_forward.1} parent=5 // pred_region
        %s359 = ssub.s32 %s26, 1
        // Predicated region
        $region13: #{self_attention_forward.1} parent=11 // pred_check
          %p360 = pneg %p99
        $region14: #{self_attention_forward.1} parent=11 // pred_check_branch
          %362 = sbr.rel (%p360) target = $region16
        $region15: #{self_attention_forward.1} parent=11 // pred_region
          _
        $region16: #{self_attention_forward.1} parent=11 // pred_fallthru
          _
        // Predicated region
        $region17: #{self_attention_forward.1} parent=11 // pred_check
          %p363 = pneg %p120
        $region18: #{self_attention_forward.1} parent=11 // pred_check_branch
          %365 = sbr.rel (%p363) target = $region20
        $region19: #{self_attention_forward.1} parent=11 // pred_region
          _
        $region20: #{self_attention_forward.1} parent=11 // pred_fallthru
          _
        // Predicated region
        $region21: #{self_attention_forward.1} parent=11 // pred_check
          %p366 = pneg %p141
        $region22: #{self_attention_forward.1} parent=11 // pred_check_branch
          %368 = sbr.rel (%p366) target = $region24
        $region23: #{self_attention_forward.1} parent=11 // pred_region
          _
        $region24: #{self_attention_forward.1} parent=11 // pred_fallthru
          _
        // Predicated region
        $region25: #{self_attention_forward.1} parent=11 // pred_check
          %p369 = pneg %p162
        $region26: #{self_attention_forward.1} parent=11 // pred_check_branch
          %371 = sbr.rel (%p369) target = $region28
        $region27: #{self_attention_forward.1} parent=11 // pred_region
          _
        $region28: #{self_attention_forward.1} parent=11 // pred_fallthru
          _
        // Predicated region
        $region29: #{self_attention_forward.1} parent=11 // pred_check
          %p372 = pneg %p183
        $region30: #{self_attention_forward.1} parent=11 // pred_check_branch
          %374 = sbr.rel (%p372) target = $region32
        $region31: #{self_attention_forward.1} parent=11 // pred_region
          _
        $region32: #{self_attention_forward.1} parent=11 // pred_fallthru
          _
        // Predicated region
        $region33: #{self_attention_forward.1} parent=11 // pred_check
          %p375 = pneg %p204
        $region34: #{self_attention_forward.1} parent=11 // pred_check_branch
          %377 = sbr.rel (%p375) target = $region36
        $region35: #{self_attention_forward.1} parent=11 // pred_region
          _
        $region36: #{self_attention_forward.1} parent=11 // pred_fallthru
          _
        // Predicated region
        $region37: #{self_attention_forward.1} parent=11 // pred_check
          %p378 = pneg %p225
        $region38: #{self_attention_forward.1} parent=11 // pred_check_branch
          %380 = sbr.rel (%p378) target = $region40
        $region39: #{self_attention_forward.1} parent=11 // pred_region
          _
        $region40: #{self_attention_forward.1} parent=11 // pred_fallthru
          _
        // Predicated region
        $region41: #{self_attention_forward.1} parent=11 // pred_check
          %p381 = pneg %p246
        $region42: #{self_attention_forward.1} parent=11 // pred_check_branch
          %383 = sbr.rel (%p381) target = $region44
        $region43: #{self_attention_forward.1} parent=11 // pred_region
          _
        $region44: #{self_attention_forward.1} parent=11 // pred_fallthru
          _
        // Predicated region
        $region45: #{self_attention_forward.1} parent=11 // pred_check
          %p384 = pneg %p267
        $region46: #{self_attention_forward.1} parent=11 // pred_check_branch
          %386 = sbr.rel (%p384) target = $region48
        $region47: #{self_attention_forward.1} parent=11 // pred_region
          _
        $region48: #{self_attention_forward.1} parent=11 // pred_fallthru
          _
      $region12: #{self_attention_forward.1} parent=5 // pred_fallthru
        _
      %p387 = scmp.lt.s32.totalorder %s26, 2
      // Predicated region
      $region49: #{self_attention_forward.1} parent=5 // pred_check
        %p388 = pneg %p387
      $region50: #{self_attention_forward.1} parent=5 // pred_check_branch
        %390 = sbr.rel (%p388) target = $region52
      $region51: #{self_attention_forward.1} parent=5 // pred_region
        // Predicated region
        $region53: #{self_attention_forward.1} parent=51 // pred_check
          %p391 = pneg %p46
        $region54: #{self_attention_forward.1} parent=51 // pred_check_branch
          %393 = sbr.rel (%p391) target = $region56
        $region55: #{self_attention_forward.1} parent=51 // pred_region
          %p394 = scmp.lt.s32.totalorder %s26, 1
          %s395 = scalar_select %p394, %s26, 1
          %s396 = smul.addr %s395, 2
          %s397 = smul.addr %s396, 4
          %s398 = scalar_lea.vmem %s0, %s397
        $region56: #{self_attention_forward.1} parent=51 // pred_fallthru
          _
        // Predicated region
        $region57: #{self_attention_forward.1} parent=51 // pred_check
          %p399 = pneg %p72
        $region58: #{self_attention_forward.1} parent=51 // pred_check_branch
          %401 = sbr.rel (%p399) target = $region60
        $region59: #{self_attention_forward.1} parent=51 // pred_region
          %p402 = scmp.lt.s32.totalorder %s26, 1
          %s403 = scalar_select %p402, %s26, 1
          %s404 = smul.addr %s403, 2
          %s405 = smul.addr %s404, 4
          %s406 = scalar_lea.vmem %s1, %s405
        $region60: #{self_attention_forward.1} parent=51 // pred_fallthru
          _
      $region52: #{self_attention_forward.1} parent=5 // pred_fallthru
        _
      %p407 = scmp.le.s32.totalorder 1, %s26
      %p408 = scmp.lt.s32.totalorder %s26, 3
      %p409 = pnand %p407, %p408
      %p410 = pneg %p409
      // Predicated region
      $region61: #{self_attention_forward.1} parent=5 // pred_check
        _
      $region62: #{self_attention_forward.1} parent=5 // pred_check_branch
        %412 = sbr.rel (%p409) target = $region64
      $region63: #{self_attention_forward.1} parent=5 // pred_region
        %s413 = ssub.s32 %s26, 1
        %p414 = scmp.lt.s32.totalorder %s31, 1
        %s415 = scalar_select %p414, %s31, 1
        %s416 = smul.addr %s415, 2
        %s417 = smul.addr %s416, 4
        %s418 = scalar_lea.vmem %s0, %s417
        %p419 = pneg %p52
        %p420 = pneg %p49
        %p421 = scmp.lt.s32.totalorder %s31, 1
        %s422 = scalar_select %p421, %s31, 1
        %s423 = smul.addr %s422, 2
        %s424 = smul.addr %s423, 4
        %s425 = scalar_lea.vmem %s1, %s424
        %p426 = pneg %p78
        %p427 = pneg %p75
        %p428 = pneg %p99
        %p429 = pneg %p96
        %p430 = pneg %p120
        %p431 = pneg %p117
        %p432 = pneg %p141
        %p433 = pneg %p138
        %p434 = pneg %p162
        %p435 = pneg %p159
        %p436 = pneg %p183
        %p437 = pneg %p180
        %p438 = pneg %p204
        %p439 = pneg %p201
        %p440 = pneg %p225
        %p441 = pneg %p222
        %p442 = pneg %p246
        %p443 = pneg %p243
        %p444 = pneg %p267
        %p445 = pneg %p264
        %p446 = pneg %p293
        %p447 = pneg %p290
        %s448 = sand.u32 %s280, 1
        %s449 = scalar_lea.sflag [#allocation3], %s448
        %s450 = sand.u32 %s280, 1
        %s451 = smul.addr %s450, 16
        %s452 = scalar_lea.vmem [#allocation2], %s451
        %p453 = pneg %p319
        %p454 = pneg %p316
        %s455 = sand.u32 %s306, 1
        %s456 = scalar_lea.sflag [#allocation5], %s455
        %s457 = sand.u32 %s306, 1
        %s458 = smul.addr %s457, 4
        %s459 = scalar_lea.vmem [#allocation4], %s458
        %p460 = pneg %p345
        %p461 = pneg %p342
        %p462 = scmp.lt.s32.totalorder %s31, 1
        %s463 = scalar_select %p462, %s31, 1
        %s464 = smul.addr %s463, 2
        %s465 = smul.addr %s464, 4
        %s466 = scalar_lea.vmem %s13, %s465
        %p467 = scmp.lt.s32.totalorder %s31, 1
        %s468 = scalar_select %p467, %s31, 1
        %s469 = smul.addr %s468, 2
        %s470 = smul.addr %s469, 4
        %s471 = scalar_lea.vmem %s0, %s470
        %p472 = scmp.lt.s32.totalorder %s31, 1
        %s473 = scalar_select %p472, %s31, 1
        %s474 = smul.addr %s473, 2
        %s475 = smul.addr %s474, 4
        %s476 = scalar_lea.vmem %s1, %s475
        %p477 = scmp.lt.s32.totalorder %s31, 1
        %s478 = scalar_select %p477, %s31, 1
        %s479 = smul.addr %s478, 2
        %s480 = smul.addr %s479, 4
        %s481 = scalar_lea.vmem %s13, %s480
        %v483 = vld [vmem:[%s471] sm:$0xff]
        %v484 = vld [vmem:[%s476] sm:$0xff]
        %v485 = vld [vmem:[%s9] sm:$0xff]
        %v486 = vld [vmem:[%s9 + $0x8] sm:$0xff]
        %v487 = vld [vmem:[%s9 + $0x10] sm:$0xff]
        %v488 = vld [vmem:[%s9 + $0x18] sm:$0xff]
        %v490 = vcombine.high %v484, %v484
        %492 = vmatprep.subr.mxu0 %v486
        %493 = vmatpush1.xpose.msra.mxu0 %v485
        %494 = vmatprep.subr.mxu0 %v488
        %495 = vmatpush1.xpose.msra.mxu0 %v487
        %496 = vmatprep.subr.mxu0 0.0
        %497 = vmatpush1.xpose.msra.mxu0 0.0
        %498 = vmatprep.subr.mxu0 0.0
        %499 = vmatpush1.xpose.msra.mxu0 0.0
        %500 = vmatprep.subr.mxu0 0.0
        %501 = vmatpush1.xpose.msra.mxu0 0.0
        %502 = vmatprep.subr.mxu0 0.0
        %503 = vmatpush1.xpose.msra.mxu0 0.0
        %504 = vmatprep.subr.mxu0 0.0
        %505 = vmatpush1.xpose.msra.mxu0 0.0
        %506 = vmatprep.subr.mxu0 0.0
        %507 = vmatpush1.xpose.msra.mxu0 0.0
        %508 = vmatprep.subr.mxu0 0.0
        %509 = vmatpush1.xpose.msra.mxu0 0.0
        %510 = vmatprep.subr.mxu0 0.0
        %511 = vmatpush1.xpose.msra.mxu0 0.0
        %512 = vmatprep.subr.mxu0 0.0
        %513 = vmatpush1.xpose.msra.mxu0 0.0
        %514 = vmatprep.subr.mxu0 0.0
        %515 = vmatpush1.xpose.msra.mxu0 0.0
        %516 = vmatprep.subr.mxu0 0.0
        %517 = vmatpush1.xpose.msra.mxu0 0.0
        %518 = vmatprep.subr.mxu0 0.0
        %519 = vmatpush1.xpose.msra.mxu0 0.0
        %520 = vmatprep.subr.mxu0 0.0
        %521 = vmatpush1.xpose.msra.mxu0 0.0
        %522 = vmatprep.subr.mxu0 0.0
        %523 = vmatpush1.xpose.msra.mxu0 0.0
        %524 = vmatprep.subr.mxu0 0.0
        %525 = vmatpush1.xpose.msra.mxu0 0.0
        %526 = vmatprep.subr.mxu0 0.0
        %527 = vmatpush1.xpose.msra.mxu0 0.0
        %528 = vmatprep.subr.mxu0 0.0
        %529 = vmatpush1.xpose.msra.mxu0 0.0
        %530 = vmatprep.subr.mxu0 0.0
        %531 = vmatpush1.xpose.msra.mxu0 0.0
        %532 = vmatprep.subr.mxu0 0.0
        %533 = vmatpush1.xpose.msra.mxu0 0.0
        %534 = vmatprep.subr.mxu0 0.0
        %535 = vmatpush1.xpose.msra.mxu0 0.0
        %536 = vmatprep.subr.mxu0 0.0
        %537 = vmatpush1.xpose.msra.mxu0 0.0
        %538 = vmatprep.subr.mxu0 0.0
        %539 = vmatpush1.xpose.msra.mxu0 0.0
        %540 = vmatprep.subr.mxu0 0.0
        %541 = vmatpush1.xpose.msra.mxu0 0.0
        %542 = vmatprep.subr.mxu0 0.0
        %543 = vmatpush1.xpose.msra.mxu0 0.0
        %544 = vmatprep.subr.mxu0 0.0
        %545 = vmatpush1.xpose.msra.mxu0 0.0
        %546 = vmatprep.subr.mxu0 0.0
        %547 = vmatpush1.xpose.msra.mxu0 0.0
        %548 = vmatprep.subr.mxu0 0.0
        %549 = vmatpush1.xpose.msra.mxu0 0.0
        %550 = vmatprep.subr.mxu0 0.0
        %551 = vmatpush1.xpose.msra.mxu0 0.0
        %552 = vmatprep.subr.mxu0 0.0
        %553 = vmatpush1.xpose.msra.mxu0 0.0
        %554 = vmatprep.subr.mxu0 0.0
        %555 = vmatpush1.xpose.msra.mxu0 0.0
        %556 = vmatprep.mubr.f32.mxu0 %v490
        %557 = vmatmul.mubr.f32.gmra.mrb[0].mxu0 %v484
        %v558 = vpop.f32.mrb[0].mxu0
        %v559 = vadd.f32 0.0, %v558
        %v560 = vpop.f32.mrb[0].mxu0
        %561 = vdwg.mxu0
        %v562 = vld [vmem:[%s2] sm:$0xff]
        %v563 = vld [vmem:[%s2 + $0x8] sm:$0xff]
        %v564 = vld [vmem:[%s2 + $0x10] sm:$0xff]
        %v565 = vpack.c.bf16 %v563, %v562
        %v566 = vpack.c.bf16 %v564, %v564
        %v567 = vpack.c.bf16 %v559, %v559
        %v568 = vld [vmem:[%s3] sm:$0xff]
        %v569 = vld [vmem:[%s3 + $0x8] sm:$0xff]
        %v570 = vld [vmem:[%s3 + $0x10] sm:$0xff]
        %572 = vset.pattern.permute.xlu0 0
        %573 = vperm.xlu0 %572, %v568
        %v574 = vpop.permute.xlu0 %573
        %577 = vset.pattern.permute.xlu0 0
        %578 = vperm.xlu0 %577, %v569
        %v579 = vpop.permute.xlu0 %578
        %582 = vset.pattern.permute.xlu0 0
        %583 = vperm.xlu0 %582, %v570
        %v584 = vpop.permute.xlu0 %583
        %vm586 = vcmask 31744
        %v588 = vsel %vm586, %v565, 0
        %v591 = vsel %vm586, %v566, 0
        %vm593 = vcmask 1041408
        %v595 = vsel %vm593, %v567, 0
        %597 = vmatprep.subr.bf16.mxu0 0
        %598 = vmatpush1.bf16.msra.mxu0 %v595
        %599 = vmatprep.subr.bf16.mxu0 0
        %600 = vmatpush1.bf16.msra.mxu0 0
        %601 = vmatprep.subr.bf16.mxu0 0
        %602 = vmatpush1.bf16.msra.mxu0 0
        %603 = vmatprep.subr.bf16.mxu0 0
        %604 = vmatpush1.bf16.msra.mxu0 0
        %605 = vmatprep.subr.bf16.mxu0 0
        %606 = vmatpush1.bf16.msra.mxu0 0
        %607 = vmatprep.subr.bf16.mxu0 0
        %608 = vmatpush1.bf16.msra.mxu0 0
        %609 = vmatprep.subr.bf16.mxu0 0
        %610 = vmatpush1.bf16.msra.mxu0 0
        %611 = vmatprep.subr.bf16.mxu0 0
        %612 = vmatpush1.bf16.msra.mxu0 0
        %613 = vmatprep.subr.bf16.mxu0 0
        %614 = vmatpush1.bf16.msra.mxu0 0
        %615 = vmatprep.subr.bf16.mxu0 0
        %616 = vmatpush1.bf16.msra.mxu0 0
        %617 = vmatprep.subr.bf16.mxu0 0
        %618 = vmatpush1.bf16.msra.mxu0 0
        %619 = vmatprep.subr.bf16.mxu0 0
        %620 = vmatpush1.bf16.msra.mxu0 0
        %621 = vmatprep.subr.bf16.mxu0 0
        %622 = vmatpush1.bf16.msra.mxu0 0
        %623 = vmatprep.subr.bf16.mxu0 0
        %624 = vmatpush1.bf16.msra.mxu0 0
        %625 = vmatprep.subr.bf16.mxu0 0
        %626 = vmatpush1.bf16.msra.mxu0 0
        %627 = vmatprep.subr.bf16.mxu0 0
        %628 = vmatpush1.bf16.msra.mxu0 0
        %629 = vmatprep.mubr.bf16.mxu0 0
        %630 = vmatmul.mubr.bf16.gmra.mrb[0].mxu0 %v588
        %v631 = vpop.f32.mrb[0].mxu0
        %v632 = vadd.f32 %v574, %v631
        %v633 = vpop.f32.mrb[0].mxu0
        %v634 = vpop.f32.mrb[0].mxu0
        %v635 = vadd.f32 %v579, %v634
        %v636 = vpop.f32.mrb[0].mxu0
        %637 = vmatprep.mubr.bf16.mxu0 0
        %638 = vmatmul.mubr.bf16.gmra.mrb[0].mxu0 %v591
        %v639 = vpop.f32.mrb[0].mxu0
        %v640 = vadd.f32 %v584, %v639
        %v641 = vpop.f32.mrb[0].mxu0
        %v642 = vpop.f32.mrb[0].mxu0
        %v643 = vpop.f32.mrb[0].mxu0
        %644 = vdwg.mxu0
        %v645 = vmul.f32 %v632, 0.35355338
        %v646 = vpack.c.bf16 %v645, %v645
        %v647 = vpack.c.bf16 %v635, %v635
        %648 = vxpose.xlu0.c.b16.start [1/8] %v646, 128
        %649 = vxpose.xlu0.c.b16.cont [2/8] 0, 128
        %650 = vxpose.xlu0.c.b16.cont [3/8] 0, 128
        %651 = vxpose.xlu0.c.b16.cont [4/8] 0, 128
        %652 = vxpose.xlu0.c.b16.cont [5/8] 0, 128
        %653 = vxpose.xlu0.c.b16.cont [6/8] 0, 128
        %654 = vxpose.xlu0.c.b16.cont [7/8] 0, 128
        %655 = vxpose.xlu0.c.b16.end [8/8] 0, 128
        %v656 = vpop.trf.xlu0
        %v657 = vpop.trf.xlu0
        %v658 = vpop.trf.xlu0
        %v659 = vpop.trf.xlu0
        %v660 = vpop.trf.xlu0
        %v661 = vpop.trf.xlu0
        %v662 = vpop.trf.xlu0
        %v663 = vpop.trf.xlu0
        %vm664 = vcmask 64512
        %v666 = vsel %vm664, %v656, 0
        %vm668 = vcmask 1043456
        %v670 = vsel %vm668, %v647, 0
        %672 = vmatprep.subr.bf16.mxu0 0
        %673 = vmatpush1.bf16.msra.mxu0 %v670
        %674 = vmatprep.subr.bf16.mxu0 0
        %675 = vmatpush1.bf16.msra.mxu0 0
        %676 = vmatprep.subr.bf16.mxu0 0
        %677 = vmatpush1.bf16.msra.mxu0 0
        %678 = vmatprep.subr.bf16.mxu0 0
        %679 = vmatpush1.bf16.msra.mxu0 0
        %680 = vmatprep.subr.bf16.mxu0 0
        %681 = vmatpush1.bf16.msra.mxu0 0
        %682 = vmatprep.subr.bf16.mxu0 0
        %683 = vmatpush1.bf16.msra.mxu0 0
        %684 = vmatprep.subr.bf16.mxu0 0
        %685 = vmatpush1.bf16.msra.mxu0 0
        %686 = vmatprep.subr.bf16.mxu0 0
        %687 = vmatpush1.bf16.msra.mxu0 0
        %688 = vmatprep.subr.bf16.mxu0 0
        %689 = vmatpush1.bf16.msra.mxu0 0
        %690 = vmatprep.subr.bf16.mxu0 0
        %691 = vmatpush1.bf16.msra.mxu0 0
        %692 = vmatprep.subr.bf16.mxu0 0
        %693 = vmatpush1.bf16.msra.mxu0 0
        %694 = vmatprep.subr.bf16.mxu0 0
        %695 = vmatpush1.bf16.msra.mxu0 0
        %696 = vmatprep.subr.bf16.mxu0 0
        %697 = vmatpush1.bf16.msra.mxu0 0
        %698 = vmatprep.subr.bf16.mxu0 0
        %699 = vmatpush1.bf16.msra.mxu0 0
        %700 = vmatprep.subr.bf16.mxu0 0
        %701 = vmatpush1.bf16.msra.mxu0 0
        %702 = vmatprep.subr.bf16.mxu0 0
        %703 = vmatpush1.bf16.msra.mxu0 0
        %704 = vmatprep.mubr.bf16.mxu0 0
        %705 = vmatmul.mubr.bf16.gmra.mrb[0].mxu0 %v666
        %v706 = vpop.f32.mrb[0].mxu0
        %v707 = vadd.f32 0.0, %v706
        %v708 = vpop.f32.mrb[0].mxu0
        %v709 = vpop.f32.mrb[0].mxu0
        %v710 = vadd.f32 0.0, %v709
        %v711 = vpop.f32.mrb[0].mxu0
        %712 = vdwg.mxu0
        %vm713 = vcmask 130048
        %v714 = vsel %vm713, %v707, -inf
        %715 = vmax.xlane.f32.xlu0 %v714
        %v716 = vpop.xlane.xlu0 %715
        %v717 = vsel %vm713, %v710, -inf
        %718 = vmax.xlane.f32.xlu0 %v717
        %v719 = vpop.xlane.xlu0 %718
        %v720 = vsub.f32 %v707, %v716
        %v721 = vsub.f32 %v710, %v719
        %v722 = vmul.f32 %v720, 1.442695
        %v723 = vpow.pop %v722
        %v724 = vmul.f32 %v721, 1.442695
        %v725 = vpow.pop %v724
        %v726 = vsel %vm713, %v723, 0.0
        %727 = vadd.xlane.f32.xlu0 %v726
        %v728 = vpop.xlane.xlu0 %727
        %v729 = vsel %vm713, %v725, 0.0
        %730 = vadd.xlane.f32.xlu0 %v729
        %v731 = vpop.xlane.xlu0 %730
        %v732 = vrcp.pop %v728
        %v733 = vrcp.pop %v731
        %v734 = vmul.f32 %v723, %v732
        %v735 = vmul.f32 %v725, %v733
        %736 = vst.msk [vmem:[%s452] sm:$0xff] %vm713, %v734
        %737 = vst.msk [vmem:[%s452 + $0x8] sm:$0xff] %vm713, %v735
        %v738 = vpack.c.bf16 %v640, %v640
        %v739 = vpack.c.bf16 %v735, %v734
        %v741 = vsel %vm713, %v738, 0
        %v744 = vsel %vm713, %v739, 0
        %746 = vmatprep.subr.bf16.mxu0 0
        %747 = vmatpush1.bf16.xpose.msra.mxu0 %v744
        %748 = vmatprep.subr.bf16.mxu0 0
        %749 = vmatpush1.bf16.xpose.msra.mxu0 0
        %750 = vmatprep.subr.bf16.mxu0 0
        %751 = vmatpush1.bf16.xpose.msra.mxu0 0
        %752 = vmatprep.subr.bf16.mxu0 0
        %753 = vmatpush1.bf16.xpose.msra.mxu0 0
        %754 = vmatprep.subr.bf16.mxu0 0
        %755 = vmatpush1.bf16.xpose.msra.mxu0 0
        %756 = vmatprep.subr.bf16.mxu0 0
        %757 = vmatpush1.bf16.xpose.msra.mxu0 0
        %758 = vmatprep.subr.bf16.mxu0 0
        %759 = vmatpush1.bf16.xpose.msra.mxu0 0
        %760 = vmatprep.subr.bf16.mxu0 0
        %761 = vmatpush1.bf16.xpose.msra.mxu0 0
        %762 = vmatprep.subr.bf16.mxu0 0
        %763 = vmatpush1.bf16.xpose.msra.mxu0 0
        %764 = vmatprep.subr.bf16.mxu0 0
        %765 = vmatpush1.bf16.xpose.msra.mxu0 0
        %766 = vmatprep.subr.bf16.mxu0 0
        %767 = vmatpush1.bf16.xpose.msra.mxu0 0
        %768 = vmatprep.subr.bf16.mxu0 0
        %769 = vmatpush1.bf16.xpose.msra.mxu0 0
        %770 = vmatprep.subr.bf16.mxu0 0
        %771 = vmatpush1.bf16.xpose.msra.mxu0 0
        %772 = vmatprep.subr.bf16.mxu0 0
        %773 = vmatpush1.bf16.xpose.msra.mxu0 0
        %774 = vmatprep.subr.bf16.mxu0 0
        %775 = vmatpush1.bf16.xpose.msra.mxu0 0
        %776 = vmatprep.subr.bf16.mxu0 0
        %777 = vmatpush1.bf16.xpose.msra.mxu0 0
        %778 = vmatprep.mubr.bf16.mxu0 0
        %779 = vmatmul.mubr.bf16.gmra.mrb[0].mxu0 %v741
        %v780 = vpop.f32.mrb[0].mxu0
        %v781 = vadd.f32 0.0, %v780
        %v782 = vpop.f32.mrb[0].mxu0
        %v783 = vpop.f32.mrb[0].mxu0
        %v784 = vpop.f32.mrb[0].mxu0
        %785 = vdwg.mxu0
        %v786 = vld [vmem:[%s4] sm:$0xf]
        %v787 = vpack.c.bf16 %v786, %v786
        %v788 = vpack.c.bf16 %v781, %v781
        %v789 = vld [vmem:[%s5] sm:$0xf]
        %791 = vset.pattern.permute.xlu0 0
        %792 = vperm.xlu0 %791, %v789
        %v793 = vpop.permute.xlu0 %792
        %v796 = vsel %vm664, %v787, 0
        %v799 = vsel %vm668, %v788, 0
        %801 = vmatprep.subr.bf16.mxu0 0
        %802 = vmatpush1.bf16.msra.mxu0 %v799
        %803 = vmatprep.subr.bf16.mxu0 0
        %804 = vmatpush1.bf16.msra.mxu0 0
        %805 = vmatprep.subr.bf16.mxu0 0
        %806 = vmatpush1.bf16.msra.mxu0 0
        %807 = vmatprep.subr.bf16.mxu0 0
        %808 = vmatpush1.bf16.msra.mxu0 0
        %809 = vmatprep.subr.bf16.mxu0 0
        %810 = vmatpush1.bf16.msra.mxu0 0
        %811 = vmatprep.subr.bf16.mxu0 0
        %812 = vmatpush1.bf16.msra.mxu0 0
        %813 = vmatprep.subr.bf16.mxu0 0
        %814 = vmatpush1.bf16.msra.mxu0 0
        %815 = vmatprep.subr.bf16.mxu0 0
        %816 = vmatpush1.bf16.msra.mxu0 0
        %817 = vmatprep.subr.bf16.mxu0 0
        %818 = vmatpush1.bf16.msra.mxu0 0
        %819 = vmatprep.subr.bf16.mxu0 0
        %820 = vmatpush1.bf16.msra.mxu0 0
        %821 = vmatprep.subr.bf16.mxu0 0
        %822 = vmatpush1.bf16.msra.mxu0 0
        %823 = vmatprep.subr.bf16.mxu0 0
        %824 = vmatpush1.bf16.msra.mxu0 0
        %825 = vmatprep.subr.bf16.mxu0 0
        %826 = vmatpush1.bf16.msra.mxu0 0
        %827 = vmatprep.subr.bf16.mxu0 0
        %828 = vmatpush1.bf16.msra.mxu0 0
        %829 = vmatprep.subr.bf16.mxu0 0
        %830 = vmatpush1.bf16.msra.mxu0 0
        %831 = vmatprep.subr.bf16.mxu0 0
        %832 = vmatpush1.bf16.msra.mxu0 0
        %833 = vmatprep.mubr.bf16.mxu0 0
        %834 = vmatmul.mubr.bf16.gmra.mrb[0].mxu0 %v796
        %v835 = vpop.f32.mrb[0].mxu0
        %v836 = vadd.f32 %v793, %v835
        %v837 = vpop.f32.mrb[0].mxu0
        %v838 = vpop.f32.mrb[0].mxu0
        %v839 = vpop.f32.mrb[0].mxu0
        %840 = vdwg.mxu0
        %v841 = vld [vmem:[%s10] sm:$0xff]
        %v842 = vld [vmem:[%s10 + $0x8] sm:$0xff]
        %v843 = vld [vmem:[%s10 + $0x10] sm:$0xff]
        %v844 = vld [vmem:[%s10 + $0x18] sm:$0xff]
        %v845 = vld [vmem:[%s10 + $0x20] sm:$0xff]
        %v846 = vld [vmem:[%s10 + $0x28] sm:$0xff]
        %v847 = vld [vmem:[%s10 + $0x30] sm:$0xff]
        %v848 = vld [vmem:[%s10 + $0x38] sm:$0xff]
        %v849 = vld [vmem:[%s10 + $0x40] sm:$0xff]
        %v850 = vld [vmem:[%s10 + $0x48] sm:$0xff]
        %v851 = vld [vmem:[%s10 + $0x50] sm:$0xff]
        %v852 = vld [vmem:[%s10 + $0x58] sm:$0xff]
        %v853 = vld [vmem:[%s10 + $0x60] sm:$0xff]
        %v854 = vld [vmem:[%s10 + $0x68] sm:$0xff]
        %v855 = vld [vmem:[%s10 + $0x70] sm:$0xff]
        %v856 = vld [vmem:[%s10 + $0x78] sm:$0xff]
        %v857 = vld [vmem:[%s10 + $0x80] sm:$0xff]
        %v858 = vld [vmem:[%s10 + $0x88] sm:$0xff]
        %v859 = vld [vmem:[%s10 + $0x90] sm:$0xff]
        %v860 = vld [vmem:[%s10 + $0x98] sm:$0xff]
        %v861 = vld [vmem:[%s10 + $0xa0] sm:$0xff]
        %v862 = vld [vmem:[%s10 + $0xa8] sm:$0xff]
        %v863 = vld [vmem:[%s10 + $0xb0] sm:$0xff]
        %v864 = vld [vmem:[%s10 + $0xb8] sm:$0xff]
        %v865 = vld [vmem:[%s10 + $0xc0] sm:$0xff]
        %v866 = vld [vmem:[%s10 + $0xc8] sm:$0xff]
        %v867 = vld [vmem:[%s10 + $0xd0] sm:$0xff]
        %v868 = vld [vmem:[%s10 + $0xd8] sm:$0xff]
        %v869 = vld [vmem:[%s10 + $0xe0] sm:$0xff]
        %v870 = vld [vmem:[%s10 + $0xe8] sm:$0xff]
        %v871 = vld [vmem:[%s10 + $0xf0] sm:$0xff]
        %v872 = vld [vmem:[%s10 + $0xf8] sm:$0xff]
        %v874 = vcombine.high %v483, %v483
        %v876 = vpack.c.bf16 %v483, %v483
        %v877 = vpack.c.bf16 %v874, %v874
        %878 = vmatprep.subr.bf16.mxu0 %v877
        %879 = vmatpush1.bf16.xpose.msra.mxu0 %v876
        %880 = vmatprep.subr.bf16.mxu0 0
        %881 = vmatpush1.bf16.xpose.msra.mxu0 0
        %882 = vmatprep.subr.bf16.mxu0 0
        %883 = vmatpush1.bf16.xpose.msra.mxu0 0
        %884 = vmatprep.subr.bf16.mxu0 0
        %885 = vmatpush1.bf16.xpose.msra.mxu0 0
        %886 = vmatprep.subr.bf16.mxu0 0
        %887 = vmatpush1.bf16.xpose.msra.mxu0 0
        %888 = vmatprep.subr.bf16.mxu0 0
        %889 = vmatpush1.bf16.xpose.msra.mxu0 0
        %890 = vmatprep.subr.bf16.mxu0 0
        %891 = vmatpush1.bf16.xpose.msra.mxu0 0
        %892 = vmatprep.subr.bf16.mxu0 0
        %893 = vmatpush1.bf16.xpose.msra.mxu0 0
        %894 = vmatprep.subr.bf16.mxu0 0
        %895 = vmatpush1.bf16.xpose.msra.mxu0 0
        %896 = vmatprep.subr.bf16.mxu0 0
        %897 = vmatpush1.bf16.xpose.msra.mxu0 0
        %898 = vmatprep.subr.bf16.mxu0 0
        %899 = vmatpush1.bf16.xpose.msra.mxu0 0
        %900 = vmatprep.subr.bf16.mxu0 0
        %901 = vmatpush1.bf16.xpose.msra.mxu0 0
        %902 = vmatprep.subr.bf16.mxu0 0
        %903 = vmatpush1.bf16.xpose.msra.mxu0 0
        %904 = vmatprep.subr.bf16.mxu0 0
        %905 = vmatpush1.bf16.xpose.msra.mxu0 0
        %906 = vmatprep.subr.bf16.mxu0 0
        %907 = vmatpush1.bf16.xpose.msra.mxu0 0
        %908 = vmatprep.subr.bf16.mxu0 0
        %909 = vmatpush1.bf16.xpose.msra.mxu0 0
        %910 = vmatprep.mubr.bf16.mxu0 %v877
        %911 = vmatmul.mubr.bf16.gmra.mrb[0].mxu0 %v876
        %v912 = vpop.f32.mrb[0].mxu0
        %v913 = vadd.f32 0.0, %v912
        %v914 = vpop.f32.mrb[0].mxu0
        %v915 = vpop.f32.mrb[0].mxu0
        %v916 = vpop.f32.mrb[0].mxu0
        %917 = vdwg.mxu0
        %v918 = vmul.f32 %v913, 0.0625
        %vm919 = vcmask 27648
        %v920 = vsel %vm919, %v918, -inf
        %921 = vmax.xlane.f32.xlu0 %v920
        %v922 = vpop.xlane.xlu0 %921
        %v923 = vsub.f32 %v918, %v922
        %v924 = vmul.f32 %v923, 1.442695
        %v925 = vpow.pop %v924
        %v926 = vsel %vm919, %v925, 0.0
        %927 = vadd.xlane.f32.xlu0 %v926
        %v928 = vpop.xlane.xlu0 %927
        %v929 = vrcp.pop %v928
        %v930 = vmul.f32 %v925, %v929
        %931 = vst.msk [vmem:[%s459] sm:$0xf] %vm919, %v930
        %v932 = vpack.c.bf16 %v930, %v930
        %v934 = vsel %vm713, %v836, 0
        %v937 = vsel %vm713, %v841, 0
        %v940 = vsel %vm713, %v842, 0
        %v943 = vsel %vm713, %v843, 0
        %v946 = vsel %vm713, %v844, 0
        %v949 = vsel %vm713, %v845, 0
        %v952 = vsel %vm713, %v846, 0
        %v955 = vsel %vm713, %v847, 0
        %v958 = vsel %vm713, %v848, 0
        %v961 = vsel %vm713, %v849, 0
        %v964 = vsel %vm713, %v850, 0
        %v967 = vsel %vm713, %v851, 0
        %v970 = vsel %vm713, %v852, 0
        %v973 = vsel %vm713, %v853, 0
        %v976 = vsel %vm713, %v854, 0
        %v979 = vsel %vm713, %v855, 0
        %v982 = vsel %vm713, %v856, 0
        %v985 = vsel %vm713, %v857, 0
        %v988 = vsel %vm713, %v858, 0
        %v991 = vsel %vm713, %v859, 0
        %v994 = vsel %vm713, %v860, 0
        %v997 = vsel %vm713, %v861, 0
        %v1000 = vsel %vm713, %v862, 0
        %v1003 = vsel %vm713, %v863, 0
        %v1006 = vsel %vm713, %v864, 0
        %v1009 = vsel %vm713, %v865, 0
        %v1012 = vsel %vm713, %v866, 0
        %v1015 = vsel %vm713, %v867, 0
        %v1018 = vsel %vm713, %v868, 0
        %v1021 = vsel %vm713, %v869, 0
        %v1024 = vsel %vm713, %v870, 0
        %v1027 = vsel %vm713, %v871, 0
        %v1030 = vsel %vm713, %v872, 0
        %1032 = vmatprep.subr.mxu0 0.0
        %1033 = vmatpush1.xpose.msra.mxu0 %v937
        %1034 = vmatprep.subr.mxu0 0.0
        %1035 = vmatpush1.xpose.msra.mxu0 %v940
        %1036 = vmatprep.subr.mxu0 0.0
        %1037 = vmatpush1.xpose.msra.mxu0 %v943
        %1038 = vmatprep.subr.mxu0 0.0
        %1039 = vmatpush1.xpose.msra.mxu0 %v946
        %1040 = vmatprep.subr.mxu0 0.0
        %1041 = vmatpush1.xpose.msra.mxu0 %v949
        %1042 = vmatprep.subr.mxu0 0.0
        %1043 = vmatpush1.xpose.msra.mxu0 %v952
        %1044 = vmatprep.subr.mxu0 0.0
        %1045 = vmatpush1.xpose.msra.mxu0 %v955
        %1046 = vmatprep.subr.mxu0 0.0
        %1047 = vmatpush1.xpose.msra.mxu0 %v958
        %1048 = vmatprep.subr.mxu0 0.0
        %1049 = vmatpush1.xpose.msra.mxu0 %v961
        %1050 = vmatprep.subr.mxu0 0.0
        %1051 = vmatpush1.xpose.msra.mxu0 %v964
        %1052 = vmatprep.subr.mxu0 0.0
        %1053 = vmatpush1.xpose.msra.mxu0 %v967
        %1054 = vmatprep.subr.mxu0 0.0
        %1055 = vmatpush1.xpose.msra.mxu0 %v970
        %1056 = vmatprep.subr.mxu0 0.0
        %1057 = vmatpush1.xpose.msra.mxu0 %v973
        %1058 = vmatprep.subr.mxu0 0.0
        %1059 = vmatpush1.xpose.msra.mxu0 %v976
        %1060 = vmatprep.subr.mxu0 0.0
        %1061 = vmatpush1.xpose.msra.mxu0 %v979
        %1062 = vmatprep.subr.mxu0 0.0
        %1063 = vmatpush1.xpose.msra.mxu0 %v982
        %1064 = vmatprep.subr.mxu0 0.0
        %1065 = vmatpush1.xpose.msra.mxu0 %v985
        %1066 = vmatprep.subr.mxu0 0.0
        %1067 = vmatpush1.xpose.msra.mxu0 %v988
        %1068 = vmatprep.subr.mxu0 0.0
        %1069 = vmatpush1.xpose.msra.mxu0 %v991
        %1070 = vmatprep.subr.mxu0 0.0
        %1071 = vmatpush1.xpose.msra.mxu0 %v994
        %1072 = vmatprep.subr.mxu0 0.0
        %1073 = vmatpush1.xpose.msra.mxu0 %v997
        %1074 = vmatprep.subr.mxu0 0.0
        %1075 = vmatpush1.xpose.msra.mxu0 %v1000
        %1076 = vmatprep.subr.mxu0 0.0
        %1077 = vmatpush1.xpose.msra.mxu0 %v1003
        %1078 = vmatprep.subr.mxu0 0.0
        %1079 = vmatpush1.xpose.msra.mxu0 %v1006
        %1080 = vmatprep.subr.mxu0 0.0
        %1081 = vmatpush1.xpose.msra.mxu0 %v1009
        %1082 = vmatprep.subr.mxu0 0.0
        %1083 = vmatpush1.xpose.msra.mxu0 %v1012
        %1084 = vmatprep.subr.mxu0 0.0
        %1085 = vmatpush1.xpose.msra.mxu0 %v1015
        %1086 = vmatprep.subr.mxu0 0.0
        %1087 = vmatpush1.xpose.msra.mxu0 %v1018
        %1088 = vmatprep.subr.mxu0 0.0
        %1089 = vmatpush1.xpose.msra.mxu0 %v1021
        %1090 = vmatprep.subr.mxu0 0.0
        %1091 = vmatpush1.xpose.msra.mxu0 %v1024
        %1092 = vmatprep.subr.mxu0 0.0
        %1093 = vmatpush1.xpose.msra.mxu0 %v1027
        %1094 = vmatprep.subr.mxu0 0.0
        %1095 = vmatpush1.xpose.msra.mxu0 %v1030
        %1096 = vmatprep.mubr.f32.mxu0 0.0
        %1097 = vmatmul.mubr.f32.gmra.mrb[0].mxu0 %v934
        %v1098 = vpop.f32.mrb[0].mxu0
        %v1099 = vadd.f32 %v483, %v1098
        %v1100 = vpop.f32.mrb[0].mxu0
        %v1101 = vadd.f32 %v874, %v1100
        %1102 = vdwg.mxu0
        %v1104 = vsel %vm586, %v932, 0
        %v1107 = vsel %vm593, %v876, 0
        %v1110 = vsel %vm593, %v877, 0
        %1112 = vmatprep.subr.bf16.mxu0 %v1110
        %1113 = vmatpush1.bf16.msra.mxu0 %v1107
        %1114 = vmatprep.subr.bf16.mxu0 0
        %1115 = vmatpush1.bf16.msra.mxu0 0
        %1116 = vmatprep.subr.bf16.mxu0 0
        %1117 = vmatpush1.bf16.msra.mxu0 0
        %1118 = vmatprep.subr.bf16.mxu0 0
        %1119 = vmatpush1.bf16.msra.mxu0 0
        %1120 = vmatprep.subr.bf16.mxu0 0
        %1121 = vmatpush1.bf16.msra.mxu0 0
        %1122 = vmatprep.subr.bf16.mxu0 0
        %1123 = vmatpush1.bf16.msra.mxu0 0
        %1124 = vmatprep.subr.bf16.mxu0 0
        %1125 = vmatpush1.bf16.msra.mxu0 0
        %1126 = vmatprep.subr.bf16.mxu0 0
        %1127 = vmatpush1.bf16.msra.mxu0 0
        %1128 = vmatprep.subr.bf16.mxu0 0
        %1129 = vmatpush1.bf16.msra.mxu0 0
        %1130 = vmatprep.subr.bf16.mxu0 0
        %1131 = vmatpush1.bf16.msra.mxu0 0
        %1132 = vmatprep.subr.bf16.mxu0 0
        %1133 = vmatpush1.bf16.msra.mxu0 0
        %1134 = vmatprep.subr.bf16.mxu0 0
        %1135 = vmatpush1.bf16.msra.mxu0 0
        %1136 = vmatprep.subr.bf16.mxu0 0
        %1137 = vmatpush1.bf16.msra.mxu0 0
        %1138 = vmatprep.subr.bf16.mxu0 0
        %1139 = vmatpush1.bf16.msra.mxu0 0
        %1140 = vmatprep.subr.bf16.mxu0 0
        %1141 = vmatpush1.bf16.msra.mxu0 0
        %1142 = vmatprep.subr.bf16.mxu0 0
        %1143 = vmatpush1.bf16.msra.mxu0 0
        %1144 = vmatprep.mubr.bf16.mxu0 0
        %1145 = vmatmul.mubr.bf16.gmra.mrb[0].mxu0 %v1104
        %v1146 = vpop.f32.mrb[0].mxu0
        %v1147 = vadd.f32 %v483, %v1146
        %v1148 = vpop.f32.mrb[0].mxu0
        %v1149 = vadd.f32 %v874, %v1148
        %v1150 = vpop.f32.mrb[0].mxu0
        %v1151 = vpop.f32.mrb[0].mxu0
        %1152 = vdwg.mxu0
        %v1153 = vld [vmem:[%s6] sm:$0xf]
        %v1154 = vpack.c.bf16 %v1153, %v1153
        %v1155 = vpack.c.bf16 %v1099, %v1099
        %v1156 = vpack.c.bf16 %v1101, %v1101
        %v1157 = vld [vmem:[%s7] sm:$0xf]
        %v1158 = vpack.c.bf16 %v1157, %v1157
        %v1159 = vpack.c.bf16 %v1147, %v1147
        %v1160 = vpack.c.bf16 %v1149, %v1149
        %v1162 = vsel %vm586, %v1158, 0
        %v1165 = vsel %vm593, %v1159, 0
        %v1168 = vsel %vm593, %v1160, 0
        %1170 = vmatprep.subr.bf16.mxu0 %v1168
        %1171 = vmatpush1.bf16.msra.mxu0 %v1165
        %1172 = vmatprep.subr.bf16.mxu0 0
        %1173 = vmatpush1.bf16.msra.mxu0 0
        %1174 = vmatprep.subr.bf16.mxu0 0
        %1175 = vmatpush1.bf16.msra.mxu0 0
        %1176 = vmatprep.subr.bf16.mxu0 0
        %1177 = vmatpush1.bf16.msra.mxu0 0
        %1178 = vmatprep.subr.bf16.mxu0 0
        %1179 = vmatpush1.bf16.msra.mxu0 0
        %1180 = vmatprep.subr.bf16.mxu0 0
        %1181 = vmatpush1.bf16.msra.mxu0 0
        %1182 = vmatprep.subr.bf16.mxu0 0
        %1183 = vmatpush1.bf16.msra.mxu0 0
        %1184 = vmatprep.subr.bf16.mxu0 0
        %1185 = vmatpush1.bf16.msra.mxu0 0
        %1186 = vmatprep.subr.bf16.mxu0 0
        %1187 = vmatpush1.bf16.msra.mxu0 0
        %1188 = vmatprep.subr.bf16.mxu0 0
        %1189 = vmatpush1.bf16.msra.mxu0 0
        %1190 = vmatprep.subr.bf16.mxu0 0
        %1191 = vmatpush1.bf16.msra.mxu0 0
        %1192 = vmatprep.subr.bf16.mxu0 0
        %1193 = vmatpush1.bf16.msra.mxu0 0
        %1194 = vmatprep.subr.bf16.mxu0 0
        %1195 = vmatpush1.bf16.msra.mxu0 0
        %1196 = vmatprep.subr.bf16.mxu0 0
        %1197 = vmatpush1.bf16.msra.mxu0 0
        %1198 = vmatprep.subr.bf16.mxu0 0
        %1199 = vmatpush1.bf16.msra.mxu0 0
        %1200 = vmatprep.subr.bf16.mxu0 0
        %1201 = vmatpush1.bf16.msra.mxu0 0
        %1202 = vmatprep.mubr.bf16.mxu0 0
        %1203 = vmatmul.mubr.bf16.gmra.mrb[0].mxu0 %v1162
        %v1204 = vpop.f32.mrb[0].mxu0
        %v1205 = vadd.f32 0.0, %v1204
        %v1206 = vpop.f32.mrb[0].mxu0
        %v1207 = vadd.f32 0.0, %v1206
        %v1208 = vpop.f32.mrb[0].mxu0
        %v1209 = vpop.f32.mrb[0].mxu0
        %1210 = vdwg.mxu0
        %v1212 = vsel %vm586, %v1154, 0
        %v1215 = vsel %vm593, %v1155, 0
        %v1218 = vsel %vm593, %v1156, 0
        %1220 = vmatprep.subr.bf16.mxu0 %v1218
        %1221 = vmatpush1.bf16.msra.mxu0 %v1215
        %1222 = vmatprep.subr.bf16.mxu0 0
        %1223 = vmatpush1.bf16.msra.mxu0 0
        %1224 = vmatprep.subr.bf16.mxu0 0
        %1225 = vmatpush1.bf16.msra.mxu0 0
        %1226 = vmatprep.subr.bf16.mxu0 0
        %1227 = vmatpush1.bf16.msra.mxu0 0
        %1228 = vmatprep.subr.bf16.mxu0 0
        %1229 = vmatpush1.bf16.msra.mxu0 0
        %1230 = vmatprep.subr.bf16.mxu0 0
        %1231 = vmatpush1.bf16.msra.mxu0 0
        %1232 = vmatprep.subr.bf16.mxu0 0
        %1233 = vmatpush1.bf16.msra.mxu0 0
        %1234 = vmatprep.subr.bf16.mxu0 0
        %1235 = vmatpush1.bf16.msra.mxu0 0
        %1236 = vmatprep.subr.bf16.mxu0 0
        %1237 = vmatpush1.bf16.msra.mxu0 0
        %1238 = vmatprep.subr.bf16.mxu0 0
        %1239 = vmatpush1.bf16.msra.mxu0 0
        %1240 = vmatprep.subr.bf16.mxu0 0
        %1241 = vmatpush1.bf16.msra.mxu0 0
        %1242 = vmatprep.subr.bf16.mxu0 0
        %1243 = vmatpush1.bf16.msra.mxu0 0
        %1244 = vmatprep.subr.bf16.mxu0 0
        %1245 = vmatpush1.bf16.msra.mxu0 0
        %1246 = vmatprep.subr.bf16.mxu0 0
        %1247 = vmatpush1.bf16.msra.mxu0 0
        %1248 = vmatprep.subr.bf16.mxu0 0
        %1249 = vmatpush1.bf16.msra.mxu0 0
        %1250 = vmatprep.subr.bf16.mxu0 0
        %1251 = vmatpush1.bf16.msra.mxu0 0
        %1252 = vmatprep.mubr.bf16.mxu0 0
        %1253 = vmatmul.mubr.bf16.gmra.mrb[0].mxu0 %v1212
        %v1254 = vpop.f32.mrb[0].mxu0
        %v1255 = vadd.f32 %v1205, %v1254
        %v1256 = vpop.f32.mrb[0].mxu0
        %v1257 = vadd.f32 %v1207, %v1256
        %v1258 = vpop.f32.mrb[0].mxu0
        %v1259 = vpop.f32.mrb[0].mxu0
        %1260 = vdwg.mxu0
        %v1261 = vld [vmem:[%s8] sm:$0xf]
        %1263 = vset.pattern.permute.xlu0 0
        %1264 = vperm.xlu0 %1263, %v1261
        %v1265 = vpop.permute.xlu0 %1264
        %v1267 = vadd.f32 %v1255, %v1265
        %v1268 = vadd.f32 %v1257, %v1265
        %v1271 = vcombine.low %v1267, %v1268
        %1273 = vst [vmem:[%s481] sm:$0xff] %v1271
        %s1274 = sand.u32 %s280, 1
        %s1275 = scalar_lea.sflag [#allocation3], %s1274
        %s1276 = sand.u32 %s280, 1
        %s1277 = smul.addr %s1276, 16
        %s1278 = scalar_lea.vmem [#allocation2], %s1277
        %s1279 = sand.u32 %s306, 1
        %s1280 = scalar_lea.sflag [#allocation5], %s1279
        %s1281 = sand.u32 %s306, 1
        %s1282 = smul.addr %s1281, 4
        %s1283 = scalar_lea.vmem [#allocation4], %s1282
        %p1284 = scmp.lt.s32.totalorder %s31, 1
        %s1285 = scalar_select %p1284, %s31, 1
        %s1286 = smul.addr %s1285, 2
        %s1287 = smul.addr %s1286, 4
        %s1288 = scalar_lea.vmem %s13, %s1287
        // Predicated region
        $region65: #{self_attention_forward.1} parent=63 // pred_check
          %p1289 = pneg %p290
        $region66: #{self_attention_forward.1} parent=63 // pred_check_branch
          %1291 = sbr.rel (%p1289) target = $region68
        $region67: #{self_attention_forward.1} parent=63 // pred_region
          %s1293 = ssub.s32 256, 256
          %1294 = vsyncadd %s1275, %s1293
          %s1295 = smul.addr %s31, 2
          %s1296 = smul.addr %s1295, 128
          %s1297 = scalar_lea.hbm %s11, %s1296
          %s1298 = sshll.u32 %s1278, 4
          %s1299 = int_to_ptr.vmem [resolvable:$true] %s1298
          %1304 = dma.vmem_to_hbm [thread:$0]  %s1299, 256, %s1297, %s1275, 128, 128, 8
        $region68: #{self_attention_forward.1} parent=63 // pred_fallthru
          _
        // Predicated region
        $region69: #{self_attention_forward.1} parent=63 // pred_check
          %p1305 = pneg %p316
        $region70: #{self_attention_forward.1} parent=63 // pred_check_branch
          %1307 = sbr.rel (%p1305) target = $region72
        $region71: #{self_attention_forward.1} parent=63 // pred_region
          %s1309 = ssub.s32 64, 64
          %1310 = vsyncadd %s1280, %s1309
          %s1311 = smul.addr %s31, 64
          %s1312 = scalar_lea.hbm %s12, %s1311
          %s1314 = sshll.u32 %s1283, 4
          %s1315 = int_to_ptr.vmem [resolvable:$true] %s1314
          %1317 = dma.vmem_to_hbm [thread:$0]  %s1315, 64, %s1312, %s1280
        $region72: #{self_attention_forward.1} parent=63 // pred_fallthru
          _
        // Predicated region
        $region73: #{self_attention_forward.1} parent=63 // pred_check
          %p1318 = pneg %p342
        $region74: #{self_attention_forward.1} parent=63 // pred_check_branch
          %1320 = sbr.rel (%p1318) target = $region76
        $region75: #{self_attention_forward.1} parent=63 // pred_region
          _
        $region76: #{self_attention_forward.1} parent=63 // pred_fallthru
          _
      $region64: #{self_attention_forward.1} parent=5 // pred_fallthru
        _
      %p1321 = scmp.le.s32.totalorder 2, %s26
      // Predicated region
      $region77: #{self_attention_forward.1} parent=5 // pred_check
        %p1322 = pneg %p1321
      $region78: #{self_attention_forward.1} parent=5 // pred_check_branch
        %1324 = sbr.rel (%p1322) target = $region80
      $region79: #{self_attention_forward.1} parent=5 // pred_region
        %s1325 = ssub.s32 %s26, 2
        // Predicated region
        $region81: #{self_attention_forward.1} parent=79 // pred_check
          %p1326 = pneg %p296
        $region82: #{self_attention_forward.1} parent=79 // pred_check_branch
          %1328 = sbr.rel (%p1326) target = $region84
        $region83: #{self_attention_forward.1} parent=79 // pred_region
          %s1329 = sand.u32 %s281, 1
          %s1330 = scalar_lea.sflag [#allocation3], %s1329
          %s1331 = sand.u32 %s281, 1
          %s1332 = smul.addr %s1331, 16
          %s1333 = scalar_lea.vmem [#allocation2], %s1332
          %1334 = dma.done %s1330, 256
        $region84: #{self_attention_forward.1} parent=79 // pred_fallthru
          _
        // Predicated region
        $region85: #{self_attention_forward.1} parent=79 // pred_check
          %p1335 = pneg %p322
        $region86: #{self_attention_forward.1} parent=79 // pred_check_branch
          %1337 = sbr.rel (%p1335) target = $region88
        $region87: #{self_attention_forward.1} parent=79 // pred_region
          %s1338 = sand.u32 %s307, 1
          %s1339 = scalar_lea.sflag [#allocation5], %s1338
          %s1340 = sand.u32 %s307, 1
          %s1341 = smul.addr %s1340, 4
          %s1342 = scalar_lea.vmem [#allocation4], %s1341
          %1343 = dma.done %s1339, 64
        $region88: #{self_attention_forward.1} parent=79 // pred_fallthru
          _
        // Predicated region
        $region89: #{self_attention_forward.1} parent=79 // pred_check
          %p1344 = pneg %p348
        $region90: #{self_attention_forward.1} parent=79 // pred_check_branch
          %1346 = sbr.rel (%p1344) target = $region92
        $region91: #{self_attention_forward.1} parent=79 // pred_region
          %p1347 = scmp.lt.s32.totalorder %s32, 1
          %s1348 = scalar_select %p1347, %s32, 1
          %s1349 = smul.addr %s1348, 2
          %s1350 = smul.addr %s1349, 4
          %s1351 = scalar_lea.vmem %s13, %s1350
        $region92: #{self_attention_forward.1} parent=79 // pred_fallthru
          _
      $region80: #{self_attention_forward.1} parent=5 // pred_fallthru
        _
    $region6: #{self_attention_forward.1} parent=1 // loop_footer
      %s30 = sadd.s32 1, %s26
    $region7: #{self_attention_forward.1} parent=1 // loop_footer_branch
      %25 = sbr.rel target = $region3
    $region8: #{self_attention_forward.1} parent=1 // loop_exit
      _
    %1352 = vsyncpa [#allocation3], 1
    %s1353 = scalar_lea.sflag [#allocation3], 1
    %1354 = vsyncpa %s1353, 1
    %1355 = vsyncpa [#allocation5], 1
    %s1356 = scalar_lea.sflag [#allocation5], 1
    %1357 = vsyncpa %s1356, 1

</llo_original>
